<compile_context>
chip_gen: v5e
topology: v5e:2x2
jax: 0.10.0
libtpu: 0.0.40
codegen_flags: <defaults>
</compile_context>

<pallas_src>
import functools

import jax
import jax.numpy as jnp
from jax.experimental import pallas as pl
from jax.experimental.pallas import tpu as pltpu


N_NEURONES = 70
DIMS = [37,
        N_NEURONES,                 # layer1:  37 -> 70
        2 * N_NEURONES,             # layer3:  70 -> 140
        N_NEURONES,                 # layer6:  140 -> 70
        int(0.5 * N_NEURONES),      # layer8:  70 -> 35
        int(0.25 * N_NEURONES),     # layer11: 35 -> 17
        4]                          # layer13: 17 -> 4

LANES = 128                         # batch tile granularity (lane axis)
DEFAULT_TILE_B = 4096               # large tiles amortize per-step overhead


def _round_up(x, m):
    return ((x + m - 1) // m) * m


def _make_mlp_kernel(mm_dtype, act_dtype):
    """Fused MLP + softmax over one (37, TILE_B) feature-major batch tile."""

    def kernel(x_ref,
               w1, b1, w2, b2, w3, b3, w4, b4, w5, b5, w6, b6,
               out_ref):
        def linear_relu(h, w_ref, b_ref):
            # MXU: (out, in) x (in, TILE_B) -> (out, TILE_B); N-dim is the
            # full lane-dense batch tile.  f32 accumulate, bias/ReLU in
            # act_dtype on the VPU.
            acc = jnp.dot(w_ref[...], h.astype(mm_dtype),
                          preferred_element_type=jnp.float32)
            a = acc.astype(act_dtype) + b_ref[...]
            return jnp.maximum(a, 0)

        h = x_ref[...]                       # (37, TILE_B), already mm_dtype
        h = linear_relu(h, w1, b1)           # layer1 + ReLU   (70, TILE_B)
        h = linear_relu(h, w2, b2)           # layer3 + ReLU   (140, TILE_B)
        # layer5 Dropout -> identity (eval)
        h = linear_relu(h, w3, b3)           # layer6 + ReLU   (70, TILE_B)
        h = linear_relu(h, w4, b4)           # layer8 + ReLU   (35, TILE_B)
        # layer10 Dropout -> identity (eval)
        h = linear_relu(h, w5, b5)           # layer11 + ReLU  (17, TILE_B)

        logits = jnp.dot(w6[...], h.astype(mm_dtype),
                         preferred_element_type=jnp.float32)
        logits = logits + b6[...].astype(jnp.float32)   # (4, TILE_B) f32

        # softmax over the feature axis (torch dim=1) == sublane axis here;
        # 4-sublane reductions are cheap XLU work, lanes stay dense.
        m = jnp.max(logits, axis=0, keepdims=True)
        e = jnp.exp(logits - m)
        denom = jnp.sum(e, axis=0, keepdims=True)
        out_ref[...] = e * pl.reciprocal(denom, approx=True)

    return kernel


@functools.partial(jax.jit,
                   static_argnames=("use_bf16", "bf16_activations", "tile_b"))
def multiclass_forward(x, params, *, use_bf16=True, bf16_activations=None,
                       tile_b=DEFAULT_TILE_B):
    """x: [B, 37] float32; params: list of (W [in,out], b [1,out]) pairs."""
    B = x.shape[0]
    mm_dtype = jnp.bfloat16 if use_bf16 else jnp.float32
    if bf16_activations is None:
        bf16_activations = use_bf16          # set False explicitly on v5e
    act_dtype = jnp.bfloat16 if (use_bf16 and bf16_activations) else jnp.float32

    # Feature-major params: W^T (out, in) in the matmul dtype, biases as
    # (out, 1) columns in the activation dtype (broadcast along lanes).
    flat = []
    for w, b in params:
        flat.append(w.T.astype(mm_dtype))
        flat.append(b.reshape(-1, 1).astype(act_dtype))

    # Batch tiling along the lane axis: TILE_B multiple of 128.  Prefer >= 2
    # grid steps when the batch allows (v7x dual-TensorCore sharding of the
    # "parallel" axis).
    B_lane = _round_up(B, LANES)
    TILE_B = min(_round_up(tile_b, LANES), B_lane)
    if B_lane // TILE_B < 2 and B_lane >= 2 * LANES:
        TILE_B = _round_up(pl.cdiv(B_lane, 2), LANES)
    B_pad = _round_up(B, TILE_B)
    if B_pad != B:
        x = jnp.pad(x, ((0, B_pad - B), (0, 0)))
    x_t = x.astype(mm_dtype).T               # (37, B_pad), lane-dense batch
    grid = (B_pad // TILE_B,)

    x_spec = pl.BlockSpec((DIMS[0], TILE_B), lambda i: (0, i))
    out_spec = pl.BlockSpec((DIMS[-1], TILE_B), lambda i: (0, i))
    # Full-array specs with constant index_map -> params stay VMEM-resident
    # across grid steps.
    param_specs = [pl.BlockSpec(a.shape, lambda i: (0, 0)) for a in flat]

    flops = 2 * B_pad * sum(DIMS[i] * DIMS[i + 1] for i in range(len(DIMS) - 1))
    param_bytes = sum(int(a.size) * a.dtype.itemsize for a in flat)
    bytes_accessed = (B_pad * (DIMS[0] * x_t.dtype.itemsize + DIMS[-1] * 4)
                      + param_bytes)

    out_t = pl.pallas_call(
        _make_mlp_kernel(mm_dtype, act_dtype),
        out_shape=jax.ShapeDtypeStruct((DIMS[-1], B_pad), jnp.float32),
        grid=grid,
        in_specs=[x_spec] + param_specs,
        out_specs=out_spec,
        compiler_params=pltpu.CompilerParams(
            dimension_semantics=("parallel",),
            vmem_limit_bytes=64 * 1024 * 1024),
        cost_estimate=pl.CostEstimate(
            flops=flops,
            transcendentals=5 * B_pad,
            bytes_accessed=bytes_accessed),
    )(x_t, *flat)
    return out_t[:, :B].T                    # back to [B, 4]


def init_params(key):
    """Deterministic synthetic parameters (uniform, roughly torch-like scale)."""
    params = []
    for i in range(len(DIMS) - 1):
        fan_in, fan_out = DIMS[i], DIMS[i + 1]
        key, kw, kb = jax.random.split(key, 3)
        bound = 1.0 / jnp.sqrt(fan_in)
        w = jax.random.uniform(kw, (fan_in, fan_out), jnp.float32,
                               minval=-bound, maxval=bound)
        b = jax.random.uniform(kb, (1, fan_out), jnp.float32,
                               minval=-bound, maxval=bound)
        params.append((w, b))
    return params


def reference_forward(x, params):
    h = x
    for i, (w, b) in enumerate(params):
        h = h @ w + b
        if i < len(params) - 1:
            h = jnp.maximum(h, 0.0)
    return jax.nn.softmax(h, axis=1)


if __name__ == "__main__":
    key = jax.random.PRNGKey(0)
    kx, kp = jax.random.split(key)
    params = init_params(kp)

    # --- Multi-tile run (grid=2 via the >=2-step cap), bf16 MXU + bf16 acts --
    B1 = 200
    x1 = jax.random.normal(kx, (B1, 37), jnp.float32)
    out1 = jax.block_until_ready(multiclass_forward(x1, params, use_bf16=True))
    ref1 = reference_forward(x1, params)
    assert out1.shape == (B1, 4)
    assert jnp.allclose(out1, ref1, atol=3e-2, rtol=3e-2), "bf16 path mismatch"
    assert jnp.allclose(jnp.sum(out1, axis=1), 1.0, atol=5e-3)

    # --- Small single-tile run, full f32 path (tighter tolerance) ------------
    B2 = 8
    x2 = jax.random.normal(jax.random.PRNGKey(1), (B2, 37), jnp.float32)
    out2 = jax.block_until_ready(
        multiclass_forward(x2, params, use_bf16=False))
    ref2 = reference_forward(x2, params)
    assert out2.shape == (B2, 4)
    assert jnp.allclose(out2, ref2, atol=5e-3, rtol=5e-3), "f32 path mismatch"
    assert jnp.allclose(jnp.sum(out2, axis=1), 1.0, atol=5e-3)

    print("KERNEL_OK")
</pallas_src>

<mosaic_0001>
module attributes {stable_mosaic.version = 11 : i64} {
  func.func @kernel(%arg0: i32, %arg1: memref<37x128xbf16, #tpu.memory_space<vmem>>, %arg2: memref<70x37xbf16, #tpu.memory_space<vmem>>, %arg3: memref<70x1xbf16, #tpu.memory_space<vmem>>, %arg4: memref<140x70xbf16, #tpu.memory_space<vmem>>, %arg5: memref<140x1xbf16, #tpu.memory_space<vmem>>, %arg6: memref<70x140xbf16, #tpu.memory_space<vmem>>, %arg7: memref<70x1xbf16, #tpu.memory_space<vmem>>, %arg8: memref<35x70xbf16, #tpu.memory_space<vmem>>, %arg9: memref<35x1xbf16, #tpu.memory_space<vmem>>, %arg10: memref<17x35xbf16, #tpu.memory_space<vmem>>, %arg11: memref<17x1xbf16, #tpu.memory_space<vmem>>, %arg12: memref<4x17xbf16, #tpu.memory_space<vmem>>, %arg13: memref<4x1xbf16, #tpu.memory_space<vmem>>, %arg14: memref<4x128xf32, #tpu.memory_space<vmem>>) attributes {dimension_semantics = [#tpu.dimension_semantics<parallel>], iteration_bounds = array<i64: 2>, scalar_prefetch = 0 : i64, scratch_operands = 0 : i64, tpu.core_type = #tpu.core_type<tc>, window_params = [{transform_indices = @transform_0, window_bounds = array<i64: 37, 128>}, {pipeline_mode = #tpu.pipeline_mode<synchronous>, transform_indices = @transform_1, window_bounds = array<i64: 70, 37>}, {pipeline_mode = #tpu.pipeline_mode<synchronous>, transform_indices = @transform_2, window_bounds = array<i64: 70, 1>}, {pipeline_mode = #tpu.pipeline_mode<synchronous>, transform_indices = @transform_3, window_bounds = array<i64: 140, 70>}, {pipeline_mode = #tpu.pipeline_mode<synchronous>, transform_indices = @transform_4, window_bounds = array<i64: 140, 1>}, {pipeline_mode = #tpu.pipeline_mode<synchronous>, transform_indices = @transform_5, window_bounds = array<i64: 70, 140>}, {pipeline_mode = #tpu.pipeline_mode<synchronous>, transform_indices = @transform_6, window_bounds = array<i64: 70, 1>}, {pipeline_mode = #tpu.pipeline_mode<synchronous>, transform_indices = @transform_7, window_bounds = array<i64: 35, 70>}, {pipeline_mode = #tpu.pipeline_mode<synchronous>, transform_indices = @transform_8, window_bounds = array<i64: 35, 1>}, {pipeline_mode = #tpu.pipeline_mode<synchronous>, transform_indices = @transform_9, window_bounds = array<i64: 17, 35>}, {pipeline_mode = #tpu.pipeline_mode<synchronous>, transform_indices = @transform_10, window_bounds = array<i64: 17, 1>}, {pipeline_mode = #tpu.pipeline_mode<synchronous>, transform_indices = @transform_11, window_bounds = array<i64: 4, 17>}, {pipeline_mode = #tpu.pipeline_mode<synchronous>, transform_indices = @transform_12, window_bounds = array<i64: 4, 1>}, {transform_indices = @transform_13, window_bounds = array<i64: 4, 128>}]} {
    %c0 = arith.constant 0 : index
    %c0_0 = arith.constant 0 : index
    %0 = vector.load %arg1[%c0, %c0_0] : memref<37x128xbf16, #tpu.memory_space<vmem>>, vector<37x128xbf16>
    %c0_1 = arith.constant 0 : index
    %c0_2 = arith.constant 0 : index
    %1 = vector.load %arg2[%c0_1, %c0_2] : memref<70x37xbf16, #tpu.memory_space<vmem>>, vector<70x37xbf16>
    %cst = arith.constant dense<0.000000e+00> : vector<70x128xf32>
    %2 = tpu.matmul %1, %0, %cst {dimension_numbers = #tpu.dot_dimension_numbers<[1], [0], [0], [1], [0, 0, 1, 1], [], []>} : vector<70x37xbf16>, vector<37x128xbf16>, vector<70x128xf32> -> vector<70x128xf32>
    %3 = arith.truncf %2 : vector<70x128xf32> to vector<70x128xbf16>
    %c0_3 = arith.constant 0 : index
    %c0_4 = arith.constant 0 : index
    %4 = vector.load %arg3[%c0_3, %c0_4] : memref<70x1xbf16, #tpu.memory_space<vmem>>, vector<70x1xbf16>
    %5 = vector.broadcast %4 : vector<70x1xbf16> to vector<70x128xbf16>
    %6 = arith.addf %3, %5 : vector<70x128xbf16>
    %cst_5 = arith.constant 0.000000e+00 : bf16
    %7 = vector.broadcast %cst_5 : bf16 to vector<70x128xbf16>
    %8 = arith.maximumf %6, %7 : vector<70x128xbf16>
    %c0_6 = arith.constant 0 : index
    %c0_7 = arith.constant 0 : index
    %9 = vector.load %arg4[%c0_6, %c0_7] : memref<140x70xbf16, #tpu.memory_space<vmem>>, vector<140x70xbf16>
    %cst_8 = arith.constant dense<0.000000e+00> : vector<140x128xf32>
    %10 = tpu.matmul %9, %8, %cst_8 {dimension_numbers = #tpu.dot_dimension_numbers<[1], [0], [0], [1], [0, 0, 1, 1], [], []>} : vector<140x70xbf16>, vector<70x128xbf16>, vector<140x128xf32> -> vector<140x128xf32>
    %11 = arith.truncf %10 : vector<140x128xf32> to vector<140x128xbf16>
    %c0_9 = arith.constant 0 : index
    %c0_10 = arith.constant 0 : index
    %12 = vector.load %arg5[%c0_9, %c0_10] : memref<140x1xbf16, #tpu.memory_space<vmem>>, vector<140x1xbf16>
    %13 = vector.broadcast %12 : vector<140x1xbf16> to vector<140x128xbf16>
    %14 = arith.addf %11, %13 : vector<140x128xbf16>
    %cst_11 = arith.constant 0.000000e+00 : bf16
    %15 = vector.broadcast %cst_11 : bf16 to vector<140x128xbf16>
    %16 = arith.maximumf %14, %15 : vector<140x128xbf16>
    %c0_12 = arith.constant 0 : index
    %c0_13 = arith.constant 0 : index
    %17 = vector.load %arg6[%c0_12, %c0_13] : memref<70x140xbf16, #tpu.memory_space<vmem>>, vector<70x140xbf16>
    %cst_14 = arith.constant dense<0.000000e+00> : vector<70x128xf32>
    %18 = tpu.matmul %17, %16, %cst_14 {dimension_numbers = #tpu.dot_dimension_numbers<[1], [0], [0], [1], [0, 0, 1, 1], [], []>} : vector<70x140xbf16>, vector<140x128xbf16>, vector<70x128xf32> -> vector<70x128xf32>
    %19 = arith.truncf %18 : vector<70x128xf32> to vector<70x128xbf16>
    %c0_15 = arith.constant 0 : index
    %c0_16 = arith.constant 0 : index
    %20 = vector.load %arg7[%c0_15, %c0_16] : memref<70x1xbf16, #tpu.memory_space<vmem>>, vector<70x1xbf16>
    %21 = vector.broadcast %20 : vector<70x1xbf16> to vector<70x128xbf16>
    %22 = arith.addf %19, %21 : vector<70x128xbf16>
    %cst_17 = arith.constant 0.000000e+00 : bf16
    %23 = vector.broadcast %cst_17 : bf16 to vector<70x128xbf16>
    %24 = arith.maximumf %22, %23 : vector<70x128xbf16>
    %c0_18 = arith.constant 0 : index
    %c0_19 = arith.constant 0 : index
    %25 = vector.load %arg8[%c0_18, %c0_19] : memref<35x70xbf16, #tpu.memory_space<vmem>>, vector<35x70xbf16>
    %cst_20 = arith.constant dense<0.000000e+00> : vector<35x128xf32>
    %26 = tpu.matmul %25, %24, %cst_20 {dimension_numbers = #tpu.dot_dimension_numbers<[1], [0], [0], [1], [0, 0, 1, 1], [], []>} : vector<35x70xbf16>, vector<70x128xbf16>, vector<35x128xf32> -> vector<35x128xf32>
    %27 = arith.truncf %26 : vector<35x128xf32> to vector<35x128xbf16>
    %c0_21 = arith.constant 0 : index
    %c0_22 = arith.constant 0 : index
    %28 = vector.load %arg9[%c0_21, %c0_22] : memref<35x1xbf16, #tpu.memory_space<vmem>>, vector<35x1xbf16>
    %29 = vector.broadcast %28 : vector<35x1xbf16> to vector<35x128xbf16>
    %30 = arith.addf %27, %29 : vector<35x128xbf16>
    %cst_23 = arith.constant 0.000000e+00 : bf16
    %31 = vector.broadcast %cst_23 : bf16 to vector<35x128xbf16>
    %32 = arith.maximumf %30, %31 : vector<35x128xbf16>
    %c0_24 = arith.constant 0 : index
    %c0_25 = arith.constant 0 : index
    %33 = vector.load %arg10[%c0_24, %c0_25] : memref<17x35xbf16, #tpu.memory_space<vmem>>, vector<17x35xbf16>
    %cst_26 = arith.constant dense<0.000000e+00> : vector<17x128xf32>
    %34 = tpu.matmul %33, %32, %cst_26 {dimension_numbers = #tpu.dot_dimension_numbers<[1], [0], [0], [1], [0, 0, 1, 1], [], []>} : vector<17x35xbf16>, vector<35x128xbf16>, vector<17x128xf32> -> vector<17x128xf32>
    %35 = arith.truncf %34 : vector<17x128xf32> to vector<17x128xbf16>
    %c0_27 = arith.constant 0 : index
    %c0_28 = arith.constant 0 : index
    %36 = vector.load %arg11[%c0_27, %c0_28] : memref<17x1xbf16, #tpu.memory_space<vmem>>, vector<17x1xbf16>
    %37 = vector.broadcast %36 : vector<17x1xbf16> to vector<17x128xbf16>
    %38 = arith.addf %35, %37 : vector<17x128xbf16>
    %cst_29 = arith.constant 0.000000e+00 : bf16
    %39 = vector.broadcast %cst_29 : bf16 to vector<17x128xbf16>
    %40 = arith.maximumf %38, %39 : vector<17x128xbf16>
    %c0_30 = arith.constant 0 : index
    %c0_31 = arith.constant 0 : index
    %41 = vector.load %arg12[%c0_30, %c0_31] : memref<4x17xbf16, #tpu.memory_space<vmem>>, vector<4x17xbf16>
    %cst_32 = arith.constant dense<0.000000e+00> : vector<4x128xf32>
    %42 = tpu.matmul %41, %40, %cst_32 {dimension_numbers = #tpu.dot_dimension_numbers<[1], [0], [0], [1], [0, 0, 1, 1], [], []>} : vector<4x17xbf16>, vector<17x128xbf16>, vector<4x128xf32> -> vector<4x128xf32>
    %c0_33 = arith.constant 0 : index
    %c0_34 = arith.constant 0 : index
    %43 = vector.load %arg13[%c0_33, %c0_34] : memref<4x1xbf16, #tpu.memory_space<vmem>>, vector<4x1xbf16>
    %44 = arith.extf %43 : vector<4x1xbf16> to vector<4x1xf32>
    %45 = vector.broadcast %44 : vector<4x1xf32> to vector<4x128xf32>
    %46 = arith.addf %42, %45 : vector<4x128xf32>
    %cst_35 = arith.constant dense<0xFF800000> : vector<128xf32>
    %47 = vector.multi_reduction <maximumf>, %46, %cst_35 [0] : vector<4x128xf32> to vector<128xf32>
    %48 = vector.shape_cast %47 : vector<128xf32> to vector<1x128xf32>
    %49 = vector.broadcast %48 : vector<1x128xf32> to vector<4x128xf32>
    %50 = arith.subf %46, %49 : vector<4x128xf32>
    %51 = math.exp %50 : vector<4x128xf32>
    %cst_36 = arith.constant dense<0.000000e+00> : vector<128xf32>
    %52 = vector.multi_reduction <add>, %51, %cst_36 [0] : vector<4x128xf32> to vector<128xf32>
    %53 = vector.shape_cast %52 : vector<128xf32> to vector<1x128xf32>
    %54 = tpu.reciprocal %53 {approx = true} : vector<1x128xf32> -> vector<1x128xf32>
    %55 = vector.broadcast %54 : vector<1x128xf32> to vector<4x128xf32>
    %56 = arith.mulf %51, %55 : vector<4x128xf32>
    %c0_37 = arith.constant 0 : index
    %c0_38 = arith.constant 0 : index
    %57 = vector.load %arg14[%c0_37, %c0_38] : memref<4x128xf32, #tpu.memory_space<vmem>>, vector<4x128xf32>
    tpu.vector_store %arg14[%c0_37, %c0_38], %56 {strides = array<i32>} : memref<4x128xf32, #tpu.memory_space<vmem>>, vector<4x128xf32>,
    return
  }
  func.func @transform_0(%arg0: i32) -> (i32, i32) {
    %c0_i32 = arith.constant 0 : i32
    %c0_i32_0 = arith.constant 0 : i32
    return %c0_i32, %arg0 : i32, i32
  }
  func.func @transform_1(%arg0: i32) -> (i32, i32) {
    %c0_i32 = arith.constant 0 : i32
    %c0_i32_0 = arith.constant 0 : i32
    %c0_i32_1 = arith.constant 0 : i32
    return %c0_i32, %c0_i32_0 : i32, i32
  }
  func.func @transform_2(%arg0: i32) -> (i32, i32) {
    %c0_i32 = arith.constant 0 : i32
    %c0_i32_0 = arith.constant 0 : i32
    %c0_i32_1 = arith.constant 0 : i32
    return %c0_i32, %c0_i32_0 : i32, i32
  }
  func.func @transform_3(%arg0: i32) -> (i32, i32) {
    %c0_i32 = arith.constant 0 : i32
    %c0_i32_0 = arith.constant 0 : i32
    %c0_i32_1 = arith.constant 0 : i32
    return %c0_i32, %c0_i32_0 : i32, i32
  }
  func.func @transform_4(%arg0: i32) -> (i32, i32) {
    %c0_i32 = arith.constant 0 : i32
    %c0_i32_0 = arith.constant 0 : i32
    %c0_i32_1 = arith.constant 0 : i32
    return %c0_i32, %c0_i32_0 : i32, i32
  }
  func.func @transform_5(%arg0: i32) -> (i32, i32) {
    %c0_i32 = arith.constant 0 : i32
    %c0_i32_0 = arith.constant 0 : i32
    %c0_i32_1 = arith.constant 0 : i32
    return %c0_i32, %c0_i32_0 : i32, i32
  }
  func.func @transform_6(%arg0: i32) -> (i32, i32) {
    %c0_i32 = arith.constant 0 : i32
    %c0_i32_0 = arith.constant 0 : i32
    %c0_i32_1 = arith.constant 0 : i32
    return %c0_i32, %c0_i32_0 : i32, i32
  }
  func.func @transform_7(%arg0: i32) -> (i32, i32) {
    %c0_i32 = arith.constant 0 : i32
    %c0_i32_0 = arith.constant 0 : i32
    %c0_i32_1 = arith.constant 0 : i32
    return %c0_i32, %c0_i32_0 : i32, i32
  }
  func.func @transform_8(%arg0: i32) -> (i32, i32) {
    %c0_i32 = arith.constant 0 : i32
    %c0_i32_0 = arith.constant 0 : i32
    %c0_i32_1 = arith.constant 0 : i32
    return %c0_i32, %c0_i32_0 : i32, i32
  }
  func.func @transform_9(%arg0: i32) -> (i32, i32) {
    %c0_i32 = arith.constant 0 : i32
    %c0_i32_0 = arith.constant 0 : i32
    %c0_i32_1 = arith.constant 0 : i32
    return %c0_i32, %c0_i32_0 : i32, i32
  }
  func.func @transform_10(%arg0: i32) -> (i32, i32) {
    %c0_i32 = arith.constant 0 : i32
    %c0_i32_0 = arith.constant 0 : i32
    %c0_i32_1 = arith.constant 0 : i32
    return %c0_i32, %c0_i32_0 : i32, i32
  }
  func.func @transform_11(%arg0: i32) -> (i32, i32) {
    %c0_i32 = arith.constant 0 : i32
    %c0_i32_0 = arith.constant 0 : i32
    %c0_i32_1 = arith.constant 0 : i32
    return %c0_i32, %c0_i32_0 : i32, i32
  }
  func.func @transform_12(%arg0: i32) -> (i32, i32) {
    %c0_i32 = arith.constant 0 : i32
    %c0_i32_0 = arith.constant 0 : i32
    %c0_i32_1 = arith.constant 0 : i32
    return %c0_i32, %c0_i32_0 : i32, i32
  }
  func.func @transform_13(%arg0: i32) -> (i32, i32) {
    %c0_i32 = arith.constant 0 : i32
    %c0_i32_0 = arith.constant 0 : i32
    return %c0_i32, %arg0 : i32, i32
  }
}

</mosaic_0001>

<llo_original>
// kernel: multiclass_forward.1
$region0: #{multiclass_forward.1}
  #allocation0 [shape = 'u32[]', space=smem, size = 0x4, offset = 0x4, fixed_abs, tag = 'smem constant byte address 0x4 - core index']
  #allocation1 [shape = 'u32[72,128]{1,0:T(1,128)}', space=vmem, size = 0x9000, scoped, tag = 'internal scratch']
  %s0 = inlined_call_operand.vmem [shape: bf16[37,256], index: 0, kind: input, shape index: {}]
  %s1 = inlined_call_operand.vmem [shape: bf16[70,37], index: 1, kind: input, shape index: {}]
  %s2 = inlined_call_operand.vmem [shape: bf16[70,1], index: 2, kind: input, shape index: {}]
  %s3 = inlined_call_operand.vmem [shape: bf16[140,70], index: 3, kind: input, shape index: {}]
  %s4 = inlined_call_operand.vmem [shape: bf16[140,1], index: 4, kind: input, shape index: {}]
  %s5 = inlined_call_operand.vmem [shape: bf16[70,140], index: 5, kind: input, shape index: {}]
  %s6 = inlined_call_operand.vmem [shape: bf16[70,1], index: 6, kind: input, shape index: {}]
  %s7 = inlined_call_operand.vmem [shape: bf16[35,70], index: 7, kind: input, shape index: {}]
  %s8 = inlined_call_operand.vmem [shape: bf16[35,1], index: 8, kind: input, shape index: {}]
  %s9 = inlined_call_operand.vmem [shape: bf16[17,35], index: 9, kind: input, shape index: {}]
  %s10 = inlined_call_operand.vmem [shape: bf16[17,1], index: 10, kind: input, shape index: {}]
  %s11 = inlined_call_operand.vmem [shape: bf16[4,17], index: 11, kind: input, shape index: {}]
  %s12 = inlined_call_operand.vmem [shape: bf16[4,1], index: 12, kind: input, shape index: {}]
  %s13 = inlined_call_operand.vmem [shape: f32[4,256], index: 13, kind: output, shape index: {}]
  %s14 = sld [smem:[#allocation0]]
  $region126: #{multiclass_forward.1} parent=0
    _
  %s16 = ssub.s32 1, %s14
  %s17 = scalar_select 0, %s16, %s14
  $region1: #{multiclass_forward.1} parent=0
    #allocation2 [shape = 'u8[20480]{0}', space=vmem, size = 0x5000, scoped, tag = 'input window, operand 0']
    loop: start=0, step=1, limit=4
    $region2: #{multiclass_forward.1} parent=1 // loop_pre_header
      _
    $region3: #{multiclass_forward.1} parent=1 // loop_header
      %s19 = sphi 0, %s23
      %p20 = scmp.ge.s32.totalorder %s19, 4
      %s29 = sphi 0, %s31
      %s32 = sphi 0, %s29
      %s33 = sphi 0, %s32
      %s49 = sphi 0, %s33
      %s53 = sphi 0, %s53
      %s55 = sphi 0, %s53
      %s56 = sphi 0, %s55
      %s70 = sphi 0, %s56
      %s74 = sphi 0, %s74
      %s76 = sphi 0, %s74
      %s77 = sphi 0, %s76
      %s91 = sphi 0, %s77
      %s95 = sphi 0, %s95
      %s97 = sphi 0, %s95
      %s98 = sphi 0, %s97
      %s112 = sphi 0, %s98
      %s116 = sphi 0, %s116
      %s118 = sphi 0, %s116
      %s119 = sphi 0, %s118
      %s133 = sphi 0, %s119
      %s137 = sphi 0, %s137
      %s139 = sphi 0, %s137
      %s140 = sphi 0, %s139
      %s154 = sphi 0, %s140
      %s158 = sphi 0, %s158
      %s160 = sphi 0, %s158
      %s161 = sphi 0, %s160
      %s175 = sphi 0, %s161
      %s179 = sphi 0, %s179
      %s181 = sphi 0, %s179
      %s182 = sphi 0, %s181
      %s196 = sphi 0, %s182
      %s200 = sphi 0, %s200
      %s202 = sphi 0, %s200
      %s203 = sphi 0, %s202
      %s217 = sphi 0, %s203
      %s221 = sphi 0, %s221
      %s223 = sphi 0, %s221
      %s224 = sphi 0, %s223
      %s238 = sphi 0, %s224
      %s242 = sphi 0, %s242
      %s244 = sphi 0, %s242
      %s245 = sphi 0, %s244
      %s259 = sphi 0, %s245
      %s263 = sphi 0, %s263
      %s265 = sphi 0, %s263
      %s266 = sphi 0, %s265
      %s280 = sphi 0, %s266
      %s284 = sphi 0, %s284
      %s286 = sphi 0, %s284
      %s287 = sphi 0, %s286
      %s301 = sphi 0, %s287
      %s307 = sphi 0, %s309
      %s310 = sphi 0, %s307
      %s311 = sphi 0, %s310
      %s327 = sphi 0, %s311
    $region4: #{multiclass_forward.1} parent=1 // loop_header_branch
      %22 = sbr.rel (%p20) target = $region8
    $region5: #{multiclass_forward.1} parent=1 // loop_body
      %s24 = ssub.s32 %s19, 1
      %s25 = ssub.s32 %s19, 2
      %s26 = sadd.s32 %s19, 1
      %s27 = ssub.s32 %s19, %s26
      %p28 = scmp.eq.s32.totalorder %s27, 0
      %s30 = sadd.s32 %s29, 1
      %s31 = scalar_select %p28, %s29, %s30
      %p34 = pneg %p28
      %p35 = scmp.eq.s32.totalorder %s19, 1
      %p36 = por %p34, %p35
      %p37 = scmp.ne.s32.totalorder %s29, %s32
      %p38 = scmp.eq.s32.totalorder %s19, 0
      %p39 = por %p37, %p38
      %p40 = scmp.ne.s32.totalorder %s29, %s32
      %p41 = scmp.eq.s32.totalorder %s24, 1
      %p42 = por %p40, %p41
      %p43 = scmp.ne.s32.totalorder %s32, %s33
      %p44 = scmp.eq.s32.totalorder %s24, 0
      %p45 = por %p43, %p44
      %p46 = scmp.ne.s32.totalorder %s32, %s33
      %p47 = scmp.eq.s32.totalorder %s25, 1
      %p48 = por %p46, %p47
      %p50 = scmp.ne.s32.totalorder %s33, %s49
      %p51 = scmp.eq.s32.totalorder %s25, 0
      %p52 = por %p50, %p51
      %s54 = sadd.s32 %s53, 1
      %p57 = scmp.eq.s32.totalorder %s19, 1
      %p58 = scmp.ne.s32.totalorder %s53, %s55
      %p59 = scmp.eq.s32.totalorder %s19, 0
      %p60 = por %p58, %p59
      %p61 = scmp.ne.s32.totalorder %s53, %s55
      %p62 = scmp.eq.s32.totalorder %s24, 1
      %p63 = por %p61, %p62
      %p64 = scmp.ne.s32.totalorder %s55, %s56
      %p65 = scmp.eq.s32.totalorder %s24, 0
      %p66 = por %p64, %p65
      %p67 = scmp.ne.s32.totalorder %s55, %s56
      %p68 = scmp.eq.s32.totalorder %s25, 1
      %p69 = por %p67, %p68
      %p71 = scmp.ne.s32.totalorder %s56, %s70
      %p72 = scmp.eq.s32.totalorder %s25, 0
      %p73 = por %p71, %p72
      %s75 = sadd.s32 %s74, 1
      %p78 = scmp.eq.s32.totalorder %s19, 1
      %p79 = scmp.ne.s32.totalorder %s74, %s76
      %p80 = scmp.eq.s32.totalorder %s19, 0
      %p81 = por %p79, %p80
      %p82 = scmp.ne.s32.totalorder %s74, %s76
      %p83 = scmp.eq.s32.totalorder %s24, 1
      %p84 = por %p82, %p83
      %p85 = scmp.ne.s32.totalorder %s76, %s77
      %p86 = scmp.eq.s32.totalorder %s24, 0
      %p87 = por %p85, %p86
      %p88 = scmp.ne.s32.totalorder %s76, %s77
      %p89 = scmp.eq.s32.totalorder %s25, 1
      %p90 = por %p88, %p89
      %p92 = scmp.ne.s32.totalorder %s77, %s91
      %p93 = scmp.eq.s32.totalorder %s25, 0
      %p94 = por %p92, %p93
      %s96 = sadd.s32 %s95, 1
      %p99 = scmp.eq.s32.totalorder %s19, 1
      %p100 = scmp.ne.s32.totalorder %s95, %s97
      %p101 = scmp.eq.s32.totalorder %s19, 0
      %p102 = por %p100, %p101
      %p103 = scmp.ne.s32.totalorder %s95, %s97
      %p104 = scmp.eq.s32.totalorder %s24, 1
      %p105 = por %p103, %p104
      %p106 = scmp.ne.s32.totalorder %s97, %s98
      %p107 = scmp.eq.s32.totalorder %s24, 0
      %p108 = por %p106, %p107
      %p109 = scmp.ne.s32.totalorder %s97, %s98
      %p110 = scmp.eq.s32.totalorder %s25, 1
      %p111 = por %p109, %p110
      %p113 = scmp.ne.s32.totalorder %s98, %s112
      %p114 = scmp.eq.s32.totalorder %s25, 0
      %p115 = por %p113, %p114
      %s117 = sadd.s32 %s116, 1
      %p120 = scmp.eq.s32.totalorder %s19, 1
      %p121 = scmp.ne.s32.totalorder %s116, %s118
      %p122 = scmp.eq.s32.totalorder %s19, 0
      %p123 = por %p121, %p122
      %p124 = scmp.ne.s32.totalorder %s116, %s118
      %p125 = scmp.eq.s32.totalorder %s24, 1
      %p126 = por %p124, %p125
      %p127 = scmp.ne.s32.totalorder %s118, %s119
      %p128 = scmp.eq.s32.totalorder %s24, 0
      %p129 = por %p127, %p128
      %p130 = scmp.ne.s32.totalorder %s118, %s119
      %p131 = scmp.eq.s32.totalorder %s25, 1
      %p132 = por %p130, %p131
      %p134 = scmp.ne.s32.totalorder %s119, %s133
      %p135 = scmp.eq.s32.totalorder %s25, 0
      %p136 = por %p134, %p135
      %s138 = sadd.s32 %s137, 1
      %p141 = scmp.eq.s32.totalorder %s19, 1
      %p142 = scmp.ne.s32.totalorder %s137, %s139
      %p143 = scmp.eq.s32.totalorder %s19, 0
      %p144 = por %p142, %p143
      %p145 = scmp.ne.s32.totalorder %s137, %s139
      %p146 = scmp.eq.s32.totalorder %s24, 1
      %p147 = por %p145, %p146
      %p148 = scmp.ne.s32.totalorder %s139, %s140
      %p149 = scmp.eq.s32.totalorder %s24, 0
      %p150 = por %p148, %p149
      %p151 = scmp.ne.s32.totalorder %s139, %s140
      %p152 = scmp.eq.s32.totalorder %s25, 1
      %p153 = por %p151, %p152
      %p155 = scmp.ne.s32.totalorder %s140, %s154
      %p156 = scmp.eq.s32.totalorder %s25, 0
      %p157 = por %p155, %p156
      %s159 = sadd.s32 %s158, 1
      %p162 = scmp.eq.s32.totalorder %s19, 1
      %p163 = scmp.ne.s32.totalorder %s158, %s160
      %p164 = scmp.eq.s32.totalorder %s19, 0
      %p165 = por %p163, %p164
      %p166 = scmp.ne.s32.totalorder %s158, %s160
      %p167 = scmp.eq.s32.totalorder %s24, 1
      %p168 = por %p166, %p167
      %p169 = scmp.ne.s32.totalorder %s160, %s161
      %p170 = scmp.eq.s32.totalorder %s24, 0
      %p171 = por %p169, %p170
      %p172 = scmp.ne.s32.totalorder %s160, %s161
      %p173 = scmp.eq.s32.totalorder %s25, 1
      %p174 = por %p172, %p173
      %p176 = scmp.ne.s32.totalorder %s161, %s175
      %p177 = scmp.eq.s32.totalorder %s25, 0
      %p178 = por %p176, %p177
      %s180 = sadd.s32 %s179, 1
      %p183 = scmp.eq.s32.totalorder %s19, 1
      %p184 = scmp.ne.s32.totalorder %s179, %s181
      %p185 = scmp.eq.s32.totalorder %s19, 0
      %p186 = por %p184, %p185
      %p187 = scmp.ne.s32.totalorder %s179, %s181
      %p188 = scmp.eq.s32.totalorder %s24, 1
      %p189 = por %p187, %p188
      %p190 = scmp.ne.s32.totalorder %s181, %s182
      %p191 = scmp.eq.s32.totalorder %s24, 0
      %p192 = por %p190, %p191
      %p193 = scmp.ne.s32.totalorder %s181, %s182
      %p194 = scmp.eq.s32.totalorder %s25, 1
      %p195 = por %p193, %p194
      %p197 = scmp.ne.s32.totalorder %s182, %s196
      %p198 = scmp.eq.s32.totalorder %s25, 0
      %p199 = por %p197, %p198
      %s201 = sadd.s32 %s200, 1
      %p204 = scmp.eq.s32.totalorder %s19, 1
      %p205 = scmp.ne.s32.totalorder %s200, %s202
      %p206 = scmp.eq.s32.totalorder %s19, 0
      %p207 = por %p205, %p206
      %p208 = scmp.ne.s32.totalorder %s200, %s202
      %p209 = scmp.eq.s32.totalorder %s24, 1
      %p210 = por %p208, %p209
      %p211 = scmp.ne.s32.totalorder %s202, %s203
      %p212 = scmp.eq.s32.totalorder %s24, 0
      %p213 = por %p211, %p212
      %p214 = scmp.ne.s32.totalorder %s202, %s203
      %p215 = scmp.eq.s32.totalorder %s25, 1
      %p216 = por %p214, %p215
      %p218 = scmp.ne.s32.totalorder %s203, %s217
      %p219 = scmp.eq.s32.totalorder %s25, 0
      %p220 = por %p218, %p219
      %s222 = sadd.s32 %s221, 1
      %p225 = scmp.eq.s32.totalorder %s19, 1
      %p226 = scmp.ne.s32.totalorder %s221, %s223
      %p227 = scmp.eq.s32.totalorder %s19, 0
      %p228 = por %p226, %p227
      %p229 = scmp.ne.s32.totalorder %s221, %s223
      %p230 = scmp.eq.s32.totalorder %s24, 1
      %p231 = por %p229, %p230
      %p232 = scmp.ne.s32.totalorder %s223, %s224
      %p233 = scmp.eq.s32.totalorder %s24, 0
      %p234 = por %p232, %p233
      %p235 = scmp.ne.s32.totalorder %s223, %s224
      %p236 = scmp.eq.s32.totalorder %s25, 1
      %p237 = por %p235, %p236
      %p239 = scmp.ne.s32.totalorder %s224, %s238
      %p240 = scmp.eq.s32.totalorder %s25, 0
      %p241 = por %p239, %p240
      %s243 = sadd.s32 %s242, 1
      %p246 = scmp.eq.s32.totalorder %s19, 1
      %p247 = scmp.ne.s32.totalorder %s242, %s244
      %p248 = scmp.eq.s32.totalorder %s19, 0
      %p249 = por %p247, %p248
      %p250 = scmp.ne.s32.totalorder %s242, %s244
      %p251 = scmp.eq.s32.totalorder %s24, 1
      %p252 = por %p250, %p251
      %p253 = scmp.ne.s32.totalorder %s244, %s245
      %p254 = scmp.eq.s32.totalorder %s24, 0
      %p255 = por %p253, %p254
      %p256 = scmp.ne.s32.totalorder %s244, %s245
      %p257 = scmp.eq.s32.totalorder %s25, 1
      %p258 = por %p256, %p257
      %p260 = scmp.ne.s32.totalorder %s245, %s259
      %p261 = scmp.eq.s32.totalorder %s25, 0
      %p262 = por %p260, %p261
      %s264 = sadd.s32 %s263, 1
      %p267 = scmp.eq.s32.totalorder %s19, 1
      %p268 = scmp.ne.s32.totalorder %s263, %s265
      %p269 = scmp.eq.s32.totalorder %s19, 0
      %p270 = por %p268, %p269
      %p271 = scmp.ne.s32.totalorder %s263, %s265
      %p272 = scmp.eq.s32.totalorder %s24, 1
      %p273 = por %p271, %p272
      %p274 = scmp.ne.s32.totalorder %s265, %s266
      %p275 = scmp.eq.s32.totalorder %s24, 0
      %p276 = por %p274, %p275
      %p277 = scmp.ne.s32.totalorder %s265, %s266
      %p278 = scmp.eq.s32.totalorder %s25, 1
      %p279 = por %p277, %p278
      %p281 = scmp.ne.s32.totalorder %s266, %s280
      %p282 = scmp.eq.s32.totalorder %s25, 0
      %p283 = por %p281, %p282
      %s285 = sadd.s32 %s284, 1
      %p288 = scmp.eq.s32.totalorder %s19, 1
      %p289 = scmp.ne.s32.totalorder %s284, %s286
      %p290 = scmp.eq.s32.totalorder %s19, 0
      %p291 = por %p289, %p290
      %p292 = scmp.ne.s32.totalorder %s284, %s286
      %p293 = scmp.eq.s32.totalorder %s24, 1
      %p294 = por %p292, %p293
      %p295 = scmp.ne.s32.totalorder %s286, %s287
      %p296 = scmp.eq.s32.totalorder %s24, 0
      %p297 = por %p295, %p296
      %p298 = scmp.ne.s32.totalorder %s286, %s287
      %p299 = scmp.eq.s32.totalorder %s25, 1
      %p300 = por %p298, %p299
      %p302 = scmp.ne.s32.totalorder %s287, %s301
      %p303 = scmp.eq.s32.totalorder %s25, 0
      %p304 = por %p302, %p303
      %s305 = ssub.s32 %s19, %s26
      %p306 = scmp.eq.s32.totalorder %s305, 0
      %s308 = sadd.s32 %s307, 1
      %s309 = scalar_select %p306, %s307, %s308
      %p312 = pneg %p306
      %p313 = scmp.eq.s32.totalorder %s19, 1
      %p314 = por %p312, %p313
      %p315 = scmp.ne.s32.totalorder %s307, %s310
      %p316 = scmp.eq.s32.totalorder %s19, 0
      %p317 = por %p315, %p316
      %p318 = scmp.ne.s32.totalorder %s307, %s310
      %p319 = scmp.eq.s32.totalorder %s24, 1
      %p320 = por %p318, %p319
      %p321 = scmp.ne.s32.totalorder %s310, %s311
      %p322 = scmp.eq.s32.totalorder %s24, 0
      %p323 = por %p321, %p322
      %p324 = scmp.ne.s32.totalorder %s310, %s311
      %p325 = scmp.eq.s32.totalorder %s25, 1
      %p326 = por %p324, %p325
      %p328 = scmp.ne.s32.totalorder %s311, %s327
      %p329 = scmp.eq.s32.totalorder %s25, 0
      %p330 = por %p328, %p329
      %p331 = scmp.le.s32.totalorder 1, %s19
      %p332 = scmp.lt.s32.totalorder %s19, 3
      %p333 = pnand %p331, %p332
      %p334 = pneg %p333
      // Predicated region
      $region9: #{multiclass_forward.1} parent=5 // pred_check
        _
      $region10: #{multiclass_forward.1} parent=5 // pred_check_branch
        %336 = sbr.rel (%p333) target = $region12
      $region11: #{multiclass_forward.1} parent=5 // pred_region
        %s337 = ssub.s32 %s19, 1
        // Predicated region
        $region13: #{multiclass_forward.1} parent=11 // pred_check
          %p338 = pneg %p66
        $region14: #{multiclass_forward.1} parent=11 // pred_check_branch
          %340 = sbr.rel (%p338) target = $region16
        $region15: #{multiclass_forward.1} parent=11 // pred_region
          _
        $region16: #{multiclass_forward.1} parent=11 // pred_fallthru
          _
        // Predicated region
        $region17: #{multiclass_forward.1} parent=11 // pred_check
          %p341 = pneg %p87
        $region18: #{multiclass_forward.1} parent=11 // pred_check_branch
          %343 = sbr.rel (%p341) target = $region20
        $region19: #{multiclass_forward.1} parent=11 // pred_region
          _
        $region20: #{multiclass_forward.1} parent=11 // pred_fallthru
          _
        // Predicated region
        $region21: #{multiclass_forward.1} parent=11 // pred_check
          %p344 = pneg %p108
        $region22: #{multiclass_forward.1} parent=11 // pred_check_branch
          %346 = sbr.rel (%p344) target = $region24
        $region23: #{multiclass_forward.1} parent=11 // pred_region
          _
        $region24: #{multiclass_forward.1} parent=11 // pred_fallthru
          _
        // Predicated region
        $region25: #{multiclass_forward.1} parent=11 // pred_check
          %p347 = pneg %p129
        $region26: #{multiclass_forward.1} parent=11 // pred_check_branch
          %349 = sbr.rel (%p347) target = $region28
        $region27: #{multiclass_forward.1} parent=11 // pred_region
          _
        $region28: #{multiclass_forward.1} parent=11 // pred_fallthru
          _
        // Predicated region
        $region29: #{multiclass_forward.1} parent=11 // pred_check
          %p350 = pneg %p150
        $region30: #{multiclass_forward.1} parent=11 // pred_check_branch
          %352 = sbr.rel (%p350) target = $region32
        $region31: #{multiclass_forward.1} parent=11 // pred_region
          _
        $region32: #{multiclass_forward.1} parent=11 // pred_fallthru
          _
        // Predicated region
        $region33: #{multiclass_forward.1} parent=11 // pred_check
          %p353 = pneg %p171
        $region34: #{multiclass_forward.1} parent=11 // pred_check_branch
          %355 = sbr.rel (%p353) target = $region36
        $region35: #{multiclass_forward.1} parent=11 // pred_region
          _
        $region36: #{multiclass_forward.1} parent=11 // pred_fallthru
          _
        // Predicated region
        $region37: #{multiclass_forward.1} parent=11 // pred_check
          %p356 = pneg %p192
        $region38: #{multiclass_forward.1} parent=11 // pred_check_branch
          %358 = sbr.rel (%p356) target = $region40
        $region39: #{multiclass_forward.1} parent=11 // pred_region
          _
        $region40: #{multiclass_forward.1} parent=11 // pred_fallthru
          _
        // Predicated region
        $region41: #{multiclass_forward.1} parent=11 // pred_check
          %p359 = pneg %p213
        $region42: #{multiclass_forward.1} parent=11 // pred_check_branch
          %361 = sbr.rel (%p359) target = $region44
        $region43: #{multiclass_forward.1} parent=11 // pred_region
          _
        $region44: #{multiclass_forward.1} parent=11 // pred_fallthru
          _
        // Predicated region
        $region45: #{multiclass_forward.1} parent=11 // pred_check
          %p362 = pneg %p234
        $region46: #{multiclass_forward.1} parent=11 // pred_check_branch
          %364 = sbr.rel (%p362) target = $region48
        $region47: #{multiclass_forward.1} parent=11 // pred_region
          _
        $region48: #{multiclass_forward.1} parent=11 // pred_fallthru
          _
        // Predicated region
        $region49: #{multiclass_forward.1} parent=11 // pred_check
          %p365 = pneg %p255
        $region50: #{multiclass_forward.1} parent=11 // pred_check_branch
          %367 = sbr.rel (%p365) target = $region52
        $region51: #{multiclass_forward.1} parent=11 // pred_region
          _
        $region52: #{multiclass_forward.1} parent=11 // pred_fallthru
          _
        // Predicated region
        $region53: #{multiclass_forward.1} parent=11 // pred_check
          %p368 = pneg %p276
        $region54: #{multiclass_forward.1} parent=11 // pred_check_branch
          %370 = sbr.rel (%p368) target = $region56
        $region55: #{multiclass_forward.1} parent=11 // pred_region
          _
        $region56: #{multiclass_forward.1} parent=11 // pred_fallthru
          _
        // Predicated region
        $region57: #{multiclass_forward.1} parent=11 // pred_check
          %p371 = pneg %p297
        $region58: #{multiclass_forward.1} parent=11 // pred_check_branch
          %373 = sbr.rel (%p371) target = $region60
        $region59: #{multiclass_forward.1} parent=11 // pred_region
          _
        $region60: #{multiclass_forward.1} parent=11 // pred_fallthru
          _
      $region12: #{multiclass_forward.1} parent=5 // pred_fallthru
        _
      %p374 = scmp.lt.s32.totalorder %s19, 2
      // Predicated region
      $region61: #{multiclass_forward.1} parent=5 // pred_check
        %p375 = pneg %p374
      $region62: #{multiclass_forward.1} parent=5 // pred_check_branch
        %377 = sbr.rel (%p375) target = $region64
      $region63: #{multiclass_forward.1} parent=5 // pred_region
        // Predicated region
        $region65: #{multiclass_forward.1} parent=63 // pred_check
          %p378 = pneg %p39
        $region66: #{multiclass_forward.1} parent=63 // pred_check_branch
          %380 = sbr.rel (%p378) target = $region68
        $region67: #{multiclass_forward.1} parent=63 // pred_region
          %s381 = sand.u32 %s29, 1
          %s382 = sand.u32 %s29, 1
          %s383 = smul.addr %s382, 20
          %s384 = scalar_lea.vmem [#allocation2], %s383
          %s385 = smul.addr %s19, 4
          %s386 = scalar_lea.vmem %s0, %s385
          // Predicated region
          $region69: #{multiclass_forward.1} parent=67 // pred_check
            _
          $region70: #{multiclass_forward.1} parent=67 // pred_check_branch
            %388 = sbr.rel (0) target = $region72
          $region71: #{multiclass_forward.1} parent=67 // pred_region
            // Predicated region
            $region73: #{multiclass_forward.1} parent=71 // pred_check
              _
            $region74: #{multiclass_forward.1} parent=71 // pred_check_branch
              %390 = sbr.rel target = $region76
            $region75: #{multiclass_forward.1} parent=71 // pred_region
              // Predicated region
              $region88: #{multiclass_forward.1} parent=75 // pred_check
                _
              $region89: #{multiclass_forward.1} parent=75 // pred_check_branch
                %414 = sbr.rel (0) target = $region91
              $region90: #{multiclass_forward.1} parent=75 // pred_region
                loop: start=0, step=1, limit=1
                $region92: #{multiclass_forward.1} parent=90 // loop_pre_header
                  _
                $region93: #{multiclass_forward.1} parent=90 // loop_header
                  %s416 = sphi 0, %s420
                  %p417 = scmp.ge.s32.totalorder %s416, 1
                  %s421 = sphi %s386, %s386
                  %s422 = sphi %s384, %s384
                $region94: #{multiclass_forward.1} parent=90 // loop_header_branch
                  %419 = sbr.rel (%p417) target = $region98
                $region95: #{multiclass_forward.1} parent=90 // loop_body
                  _
                $region96: #{multiclass_forward.1} parent=90 // loop_footer
                  %s420 = sadd.s32 1, %s416
                $region97: #{multiclass_forward.1} parent=90 // loop_footer_branch
                  %415 = sbr.rel target = $region93
                $region98: #{multiclass_forward.1} parent=90 // loop_exit
                  _
                %s424 = ssub.s32 16, 1
                loop: start=0, step=1, limit=1
                $region99: #{multiclass_forward.1} parent=90 // loop_pre_header
                  _
                $region100: #{multiclass_forward.1} parent=90 // loop_header
                  %s426 = sphi 0, %s430
                  %p427 = scmp.ge.s32.totalorder %s426, 1
                  %s431 = sphi %s386, %s386
                  %s432 = sphi %s384, %s384
                $region101: #{multiclass_forward.1} parent=90 // loop_header_branch
                  %429 = sbr.rel (%p427) target = $region105
                $region102: #{multiclass_forward.1} parent=90 // loop_body
                  %v433 = vld [vmem:[%s431] sm:%s424]
                  %434 = vst [vmem:[%s432] sm:%s424] %v433
                  %v435 = vld [vmem:[%s431 + $0x8] sm:%s424]
                  %436 = vst [vmem:[%s432 + $0x4] sm:%s424] %v435
                  %v437 = vld [vmem:[%s431 + $0x10] sm:%s424]
                  %438 = vst [vmem:[%s432 + $0x8] sm:%s424] %v437
                  %v439 = vld [vmem:[%s431 + $0x18] sm:%s424]
                  %440 = vst [vmem:[%s432 + $0xc] sm:%s424] %v439
                  %v441 = vld [vmem:[%s431 + $0x20] sm:%s424]
                  %442 = vst [vmem:[%s432 + $0x10] sm:%s424] %v441
                $region103: #{multiclass_forward.1} parent=90 // loop_footer
                  %s430 = sadd.s32 1, %s426
                $region104: #{multiclass_forward.1} parent=90 // loop_footer_branch
                  %425 = sbr.rel target = $region100
                $region105: #{multiclass_forward.1} parent=90 // loop_exit
                  _
              $region91: #{multiclass_forward.1} parent=75 // pred_fallthru
                _
            $region76: #{multiclass_forward.1} parent=71 // pred_fallthru
              _
            // Predicated region
            $region77: #{multiclass_forward.1} parent=71 // pred_check
              _
            $region78: #{multiclass_forward.1} parent=71 // pred_check_branch
              %392 = sbr.rel (0) target = $region80
            $region79: #{multiclass_forward.1} parent=71 // pred_region
              %s394 = ssub.s32 16, 1
              loop: start=0, step=1, limit=1
              $region81: #{multiclass_forward.1} parent=79 // loop_pre_header
                _
              $region82: #{multiclass_forward.1} parent=79 // loop_header
                %s396 = sphi 0, %s400
                %p397 = scmp.ge.s32.totalorder %s396, 1
                %s401 = sphi %s386, %s386
                %s402 = sphi %s384, %s384
              $region83: #{multiclass_forward.1} parent=79 // loop_header_branch
                %399 = sbr.rel (%p397) target = $region87
              $region84: #{multiclass_forward.1} parent=79 // loop_body
                %v403 = vld [vmem:[%s401] sm:%s394]
                %404 = vst [vmem:[%s402] sm:%s394] %v403
                %v405 = vld [vmem:[%s401 + $0x8] sm:%s394]
                %406 = vst [vmem:[%s402 + $0x4] sm:%s394] %v405
                %v407 = vld [vmem:[%s401 + $0x10] sm:%s394]
                %408 = vst [vmem:[%s402 + $0x8] sm:%s394] %v407
                %v409 = vld [vmem:[%s401 + $0x18] sm:%s394]
                %410 = vst [vmem:[%s402 + $0xc] sm:%s394] %v409
                %v411 = vld [vmem:[%s401 + $0x20] sm:%s394]
                %412 = vst [vmem:[%s402 + $0x10] sm:%s394] %v411
              $region85: #{multiclass_forward.1} parent=79 // loop_footer
                %s400 = sadd.s32 1, %s396
              $region86: #{multiclass_forward.1} parent=79 // loop_footer_branch
                %395 = sbr.rel target = $region82
              $region87: #{multiclass_forward.1} parent=79 // loop_exit
                _
            $region80: #{multiclass_forward.1} parent=71 // pred_fallthru
              _
          $region72: #{multiclass_forward.1} parent=67 // pred_fallthru
            _
          %443 = vnop
        $region68: #{multiclass_forward.1} parent=63 // pred_fallthru
          _
      $region64: #{multiclass_forward.1} parent=5 // pred_fallthru
        _
      %p444 = scmp.le.s32.totalorder 1, %s19
      %p445 = scmp.lt.s32.totalorder %s19, 3
      %p446 = pnand %p444, %p445
      %p447 = pneg %p446
      // Predicated region
      $region106: #{multiclass_forward.1} parent=5 // pred_check
        _
      $region107: #{multiclass_forward.1} parent=5 // pred_check_branch
        %449 = sbr.rel (%p446) target = $region109
      $region108: #{multiclass_forward.1} parent=5 // pred_region
        %s450 = ssub.s32 %s19, 1
        %s451 = sand.u32 %s32, 1
        %s452 = sand.u32 %s32, 1
        %s453 = smul.addr %s452, 20
        %s454 = scalar_lea.vmem [#allocation2], %s453
        // Predicated region
        $region110: #{multiclass_forward.1} parent=108 // pred_check
          %p455 = pneg %p45
        $region111: #{multiclass_forward.1} parent=108 // pred_check_branch
          %457 = sbr.rel (%p455) target = $region113
        $region112: #{multiclass_forward.1} parent=108 // pred_region
          _
        $region113: #{multiclass_forward.1} parent=108 // pred_fallthru
          _
        %s458 = sand.u32 %s32, 1
        %s459 = sand.u32 %s32, 1
        %s460 = smul.addr %s459, 20
        %s461 = scalar_lea.vmem [#allocation2], %s460
        %p462 = pneg %p45
        %p463 = pneg %p42
        %p464 = pneg %p66
        %p465 = pneg %p63
        %p466 = pneg %p87
        %p467 = pneg %p84
        %p468 = pneg %p108
        %p469 = pneg %p105
        %p470 = pneg %p129
        %p471 = pneg %p126
        %p472 = pneg %p150
        %p473 = pneg %p147
        %p474 = pneg %p171
        %p475 = pneg %p168
        %p476 = pneg %p192
        %p477 = pneg %p189
        %p478 = pneg %p213
        %p479 = pneg %p210
        %p480 = pneg %p234
        %p481 = pneg %p231
        %p482 = pneg %p255
        %p483 = pneg %p252
        %p484 = pneg %p276
        %p485 = pneg %p273
        %p486 = pneg %p297
        %p487 = pneg %p294
        %p488 = pneg %p323
        %p489 = pneg %p320
        %p490 = scmp.lt.s32.totalorder %s24, 1
        %s491 = scalar_select %p490, %s24, 1
        %s492 = smul.addr %s491, 4
        %s493 = scalar_lea.vmem %s13, %s492
        %p494 = scmp.lt.s32.totalorder %s24, 1
        %s495 = scalar_select %p494, %s24, 1
        %s496 = smul.addr %s495, 4
        %s497 = scalar_lea.vmem %s13, %s496
        %v499 = vld [vmem:[%s454] sm:$0xf]
        %v500 = vld [vmem:[%s454 + $0x4] sm:$0xf]
        %v501 = vld [vmem:[%s454 + $0x8] sm:$0xf]
        %v502 = vld [vmem:[%s454 + $0xc] sm:$0xf]
        %v503 = vld [vmem:[%s454 + $0x10] sm:$0x7]
        %v504 = vld [vmem:[%s1] sm:$0xf]
        %v505 = vld [vmem:[%s1 + $0x4] sm:$0xf]
        %v506 = vld [vmem:[%s1 + $0x8] sm:$0xf]
        %v507 = vld [vmem:[%s1 + $0xc] sm:$0xf]
        %v508 = vld [vmem:[%s1 + $0x10] sm:$0xf]
        %v509 = vld [vmem:[%s1 + $0x14] sm:$0xf]
        %v510 = vld [vmem:[%s1 + $0x18] sm:$0xf]
        %v511 = vld [vmem:[%s1 + $0x1c] sm:$0xf]
        %v512 = vld [vmem:[%s1 + $0x20] sm:$0x7]
        %v522 = vunpack.c.l.b16 %v504
        %v523 = vunpack.c.l.b16 %v505
        %v524 = vunpack.c.l.b16 %v506
        %v525 = vunpack.c.l.b16 %v507
        %v526 = vunpack.c.l.b16 %v508
        %v527 = vunpack.c.l.b16 %v509
        %v528 = vunpack.c.l.b16 %v510
        %v529 = vunpack.c.l.b16 %v511
        %v530 = vunpack.c.l.b16 %v512
        %v531 = vpack.c.b16 %v523, %v522
        %v532 = vpack.c.b16 %v525, %v524
        %v533 = vpack.c.b16 %v527, %v526
        %v534 = vpack.c.b16 %v529, %v528
        %v535 = vpack.c.b16 %v530, %v530
        %v541 = vunpack.c.l.b16 %v499
        %v542 = vunpack.c.l.b16 %v500
        %v543 = vunpack.c.l.b16 %v501
        %v544 = vunpack.c.l.b16 %v502
        %v545 = vunpack.c.l.b16 %v503
        %v546 = vpack.c.b16 %v542, %v541
        %v547 = vpack.c.b16 %v544, %v543
        %v548 = vpack.c.b16 %v545, %v545
        %vm551 = vcmask 302080
        %v553 = vsel %vm551, %v531, 0
        %v556 = vsel %vm551, %v532, 0
        %v559 = vsel %vm551, %v533, 0
        %v562 = vsel %vm551, %v534, 0
        %v565 = vsel %vm551, %v535, 0
        %vm567 = vcmask 1041408
        %vm568 = vcmask 1042432
        %v569 = vsel %vm567, 4294967295, 65535
        %v570 = vsel %vm568, %v569, 0
        %v572 = vand.u32 %v548, %v570
        %574 = vmatpush.bf16.msra.mxu0 0
        %575 = vmatpush.bf16.msra.mxu0 0
        %576 = vmatpush.bf16.msra.mxu0 0
        %577 = vmatpush.bf16.msra.mxu0 0
        %578 = vmatpush.bf16.msra.mxu0 0
        %579 = vmatpush.bf16.msra.mxu0 %v572
        %580 = vmatpush.bf16.msra.mxu0 %v547
        %581 = vmatpush.bf16.msra.mxu0 %v546
        %582 = vmatmul.bf16.gmra.mxu0 %v553
        %v583 = vpop.f32.mrf.mxu0
        %v584 = vadd.f32 0.0, %v583
        %v585 = vpop.f32.mrf.mxu0
        %v586 = vadd.f32 0.0, %v585
        %587 = vmatmul.bf16.gmra.mxu0 %v556
        %v588 = vpop.f32.mrf.mxu0
        %v589 = vadd.f32 0.0, %v588
        %v590 = vpop.f32.mrf.mxu0
        %v591 = vadd.f32 0.0, %v590
        %592 = vmatmul.bf16.gmra.mxu0 %v559
        %v593 = vpop.f32.mrf.mxu0
        %v594 = vadd.f32 0.0, %v593
        %v595 = vpop.f32.mrf.mxu0
        %v596 = vadd.f32 0.0, %v595
        %597 = vmatmul.bf16.gmra.mxu0 %v562
        %v598 = vpop.f32.mrf.mxu0
        %v599 = vadd.f32 0.0, %v598
        %v600 = vpop.f32.mrf.mxu0
        %v601 = vadd.f32 0.0, %v600
        %602 = vmatmul.bf16.gmra.mxu0 %v565
        %v603 = vpop.f32.mrf.mxu0
        %v604 = vadd.f32 0.0, %v603
        %v605 = vpop.f32.mrf.mxu0
        %606 = vdwg.mxu0
        %v607 = vpack.c.bf16 %v584, %v584
        %v608 = vpack.c.bf16 %v586, %v586
        %v609 = vpack.c.bf16 %v589, %v589
        %v610 = vpack.c.bf16 %v591, %v591
        %v611 = vpack.c.bf16 %v594, %v594
        %v612 = vpack.c.bf16 %v596, %v596
        %v613 = vpack.c.bf16 %v599, %v599
        %v614 = vpack.c.bf16 %v601, %v601
        %v615 = vpack.c.bf16 %v604, %v604
        %v616 = vld [vmem:[%s2] sm:$0xf]
        %v617 = vld [vmem:[%s2 + $0x4] sm:$0xf]
        %v618 = vld [vmem:[%s2 + $0x8] sm:$0xf]
        %v619 = vld [vmem:[%s2 + $0xc] sm:$0xf]
        %v620 = vld [vmem:[%s2 + $0x10] sm:$0xf]
        %v621 = vld [vmem:[%s2 + $0x14] sm:$0xf]
        %v622 = vld [vmem:[%s2 + $0x18] sm:$0xf]
        %v623 = vld [vmem:[%s2 + $0x1c] sm:$0xf]
        %v624 = vld [vmem:[%s2 + $0x20] sm:$0x7]
        %626 = vset.pattern.permute.xlu0 0
        %627 = vperm.xlu0 %626, %v616
        %v628 = vpop.permute.xlu0 %627
        %v631 = vunpack.c.l.s4 839922192
        %v632 = vunpack.c.0.s8 %v631
        %v633 = vperm.slane %v628, %v632
        %635 = vset.pattern.permute.xlu0 0
        %636 = vperm.xlu0 %635, %v617
        %v637 = vpop.permute.xlu0 %636
        %v640 = vunpack.c.l.s4 839922192
        %v641 = vunpack.c.0.s8 %v640
        %v642 = vperm.slane %v637, %v641
        %644 = vset.pattern.permute.xlu0 0
        %645 = vperm.xlu0 %644, %v618
        %v646 = vpop.permute.xlu0 %645
        %v649 = vunpack.c.l.s4 839922192
        %v650 = vunpack.c.0.s8 %v649
        %v651 = vperm.slane %v646, %v650
        %653 = vset.pattern.permute.xlu0 0
        %654 = vperm.xlu0 %653, %v619
        %v655 = vpop.permute.xlu0 %654
        %v658 = vunpack.c.l.s4 839922192
        %v659 = vunpack.c.0.s8 %v658
        %v660 = vperm.slane %v655, %v659
        %662 = vset.pattern.permute.xlu0 0
        %663 = vperm.xlu0 %662, %v620
        %v664 = vpop.permute.xlu0 %663
        %v667 = vunpack.c.l.s4 839922192
        %v668 = vunpack.c.0.s8 %v667
        %v669 = vperm.slane %v664, %v668
        %671 = vset.pattern.permute.xlu0 0
        %672 = vperm.xlu0 %671, %v621
        %v673 = vpop.permute.xlu0 %672
        %v676 = vunpack.c.l.s4 839922192
        %v677 = vunpack.c.0.s8 %v676
        %v678 = vperm.slane %v673, %v677
        %680 = vset.pattern.permute.xlu0 0
        %681 = vperm.xlu0 %680, %v622
        %v682 = vpop.permute.xlu0 %681
        %v685 = vunpack.c.l.s4 839922192
        %v686 = vunpack.c.0.s8 %v685
        %v687 = vperm.slane %v682, %v686
        %689 = vset.pattern.permute.xlu0 0
        %690 = vperm.xlu0 %689, %v623
        %v691 = vpop.permute.xlu0 %690
        %v694 = vunpack.c.l.s4 839922192
        %v695 = vunpack.c.0.s8 %v694
        %v696 = vperm.slane %v691, %v695
        %698 = vset.pattern.permute.xlu0 0
        %699 = vperm.xlu0 %698, %v624
        %v700 = vpop.permute.xlu0 %699
        %v703 = vunpack.c.l.s4 839922192
        %v704 = vunpack.c.0.s8 %v703
        %v705 = vperm.slane %v700, %v704
        %v706 = vunpack.c.l.bf16 %v607
        %v707 = vunpack.c.l.bf16 %v608
        %v708 = vunpack.c.l.bf16 %v609
        %v709 = vunpack.c.l.bf16 %v610
        %v710 = vunpack.c.l.bf16 %v611
        %v711 = vunpack.c.l.bf16 %v612
        %v712 = vunpack.c.l.bf16 %v613
        %v713 = vunpack.c.l.bf16 %v614
        %v714 = vunpack.c.l.bf16 %v615
        %v715 = vunpack.c.l.bf16 %v633
        %v716 = vunpack.c.l.bf16 %v642
        %v717 = vunpack.c.l.bf16 %v651
        %v718 = vunpack.c.l.bf16 %v660
        %v719 = vunpack.c.l.bf16 %v669
        %v720 = vunpack.c.l.bf16 %v678
        %v721 = vunpack.c.l.bf16 %v687
        %v722 = vunpack.c.l.bf16 %v696
        %v723 = vunpack.c.l.bf16 %v705
        %v724 = vadd.f32 %v706, %v715
        %v725 = vadd.f32 %v707, %v716
        %v726 = vadd.f32 %v708, %v717
        %v727 = vadd.f32 %v709, %v718
        %v728 = vadd.f32 %v710, %v719
        %v729 = vadd.f32 %v711, %v720
        %v730 = vadd.f32 %v712, %v721
        %v731 = vadd.f32 %v713, %v722
        %v732 = vadd.f32 %v714, %v723
        %v733 = vpack.c.bf16 %v724, %v724
        %v734 = vpack.c.bf16 %v725, %v725
        %v735 = vpack.c.bf16 %v726, %v726
        %v736 = vpack.c.bf16 %v727, %v727
        %v737 = vpack.c.bf16 %v728, %v728
        %v738 = vpack.c.bf16 %v729, %v729
        %v739 = vpack.c.bf16 %v730, %v730
        %v740 = vpack.c.bf16 %v731, %v731
        %v741 = vpack.c.bf16 %v732, %v732
        %v742 = vunpack.c.l.bf16 %v733
        %v743 = vunpack.c.l.bf16 %v734
        %v744 = vunpack.c.l.bf16 %v735
        %v745 = vunpack.c.l.bf16 %v736
        %v746 = vunpack.c.l.bf16 %v737
        %v747 = vunpack.c.l.bf16 %v738
        %v748 = vunpack.c.l.bf16 %v739
        %v749 = vunpack.c.l.bf16 %v740
        %v750 = vunpack.c.l.bf16 %v741
        %v751 = vmax.f32 %v742, 0.0
        %v752 = vmax.f32 %v743, 0.0
        %v753 = vmax.f32 %v744, 0.0
        %v754 = vmax.f32 %v745, 0.0
        %v755 = vmax.f32 %v746, 0.0
        %v756 = vmax.f32 %v747, 0.0
        %v757 = vmax.f32 %v748, 0.0
        %v758 = vmax.f32 %v749, 0.0
        %v759 = vmax.f32 %v750, 0.0
        %v760 = vpack.c.bf16 %v752, %v751
        %v761 = vpack.c.bf16 %v754, %v753
        %v762 = vpack.c.bf16 %v756, %v755
        %v763 = vpack.c.bf16 %v758, %v757
        %v764 = vpack.c.bf16 %v759, %v759
        %v765 = vld [vmem:[%s3] sm:$0xf]
        %v766 = vld [vmem:[%s3 + $0x4] sm:$0xf]
        %v767 = vld [vmem:[%s3 + $0x8] sm:$0xf]
        %v768 = vld [vmem:[%s3 + $0xc] sm:$0xf]
        %v769 = vld [vmem:[%s3 + $0x10] sm:$0xf]
        %v770 = vld [vmem:[%s3 + $0x14] sm:$0xf]
        %v771 = vld [vmem:[%s3 + $0x18] sm:$0xf]
        %v772 = vld [vmem:[%s3 + $0x1c] sm:$0xf]
        %v773 = vld [vmem:[%s3 + $0x20] sm:$0xf]
        %v774 = vld [vmem:[%s3 + $0x24] sm:$0xf]
        %v775 = vld [vmem:[%s3 + $0x28] sm:$0xf]
        %v776 = vld [vmem:[%s3 + $0x2c] sm:$0xf]
        %v777 = vld [vmem:[%s3 + $0x30] sm:$0xf]
        %v778 = vld [vmem:[%s3 + $0x34] sm:$0xf]
        %v779 = vld [vmem:[%s3 + $0x38] sm:$0xf]
        %v780 = vld [vmem:[%s3 + $0x3c] sm:$0xf]
        %v781 = vld [vmem:[%s3 + $0x40] sm:$0xf]
        %v782 = vld [vmem:[%s3 + $0x44] sm:$0x3]
        %v801 = vunpack.c.l.b16 %v765
        %v802 = vunpack.c.l.b16 %v766
        %v803 = vunpack.c.l.b16 %v767
        %v804 = vunpack.c.l.b16 %v768
        %v805 = vunpack.c.l.b16 %v769
        %v806 = vunpack.c.l.b16 %v770
        %v807 = vunpack.c.l.b16 %v771
        %v808 = vunpack.c.l.b16 %v772
        %v809 = vunpack.c.l.b16 %v773
        %v810 = vunpack.c.l.b16 %v774
        %v811 = vunpack.c.l.b16 %v775
        %v812 = vunpack.c.l.b16 %v776
        %v813 = vunpack.c.l.b16 %v777
        %v814 = vunpack.c.l.b16 %v778
        %v815 = vunpack.c.l.b16 %v779
        %v816 = vunpack.c.l.b16 %v780
        %v817 = vunpack.c.l.b16 %v781
        %v818 = vunpack.c.l.b16 %v782
        %v819 = vpack.c.b16 %v802, %v801
        %v820 = vpack.c.b16 %v804, %v803
        %v821 = vpack.c.b16 %v806, %v805
        %v822 = vpack.c.b16 %v808, %v807
        %v823 = vpack.c.b16 %v810, %v809
        %v824 = vpack.c.b16 %v812, %v811
        %v825 = vpack.c.b16 %v814, %v813
        %v826 = vpack.c.b16 %v816, %v815
        %v827 = vpack.c.b16 %v818, %v817
        %vm828 = vcmask 572416
        %v830 = vsel %vm828, %v819, 0
        %v833 = vsel %vm828, %v820, 0
        %v836 = vsel %vm828, %v821, 0
        %v839 = vsel %vm828, %v822, 0
        %v842 = vsel %vm828, %v823, 0
        %v845 = vsel %vm828, %v824, 0
        %v848 = vsel %vm828, %v825, 0
        %v851 = vsel %vm828, %v826, 0
        %v854 = vsel %vm828, %v827, 0
        %v857 = vsel %vm568, %v764, 0
        %859 = vmatpush.bf16.msra.mxu0 0
        %860 = vmatpush.bf16.msra.mxu0 0
        %861 = vmatpush.bf16.msra.mxu0 0
        %862 = vmatpush.bf16.msra.mxu0 %v857
        %863 = vmatpush.bf16.msra.mxu0 %v763
        %864 = vmatpush.bf16.msra.mxu0 %v762
        %865 = vmatpush.bf16.msra.mxu0 %v761
        %866 = vmatpush.bf16.msra.mxu0 %v760
        %867 = vmatmul.bf16.gmra.mxu0 %v830
        %v868 = vpop.f32.mrf.mxu0
        %v869 = vadd.f32 0.0, %v868
        %v870 = vpop.f32.mrf.mxu0
        %v871 = vadd.f32 0.0, %v870
        %872 = vmatmul.bf16.gmra.mxu0 %v833
        %v873 = vpop.f32.mrf.mxu0
        %v874 = vadd.f32 0.0, %v873
        %v875 = vpop.f32.mrf.mxu0
        %v876 = vadd.f32 0.0, %v875
        %877 = vmatmul.bf16.gmra.mxu0 %v836
        %v878 = vpop.f32.mrf.mxu0
        %v879 = vadd.f32 0.0, %v878
        %v880 = vpop.f32.mrf.mxu0
        %v881 = vadd.f32 0.0, %v880
        %882 = vmatmul.bf16.gmra.mxu0 %v839
        %v883 = vpop.f32.mrf.mxu0
        %v884 = vadd.f32 0.0, %v883
        %v885 = vpop.f32.mrf.mxu0
        %v886 = vadd.f32 0.0, %v885
        %887 = vmatmul.bf16.gmra.mxu0 %v842
        %v888 = vpop.f32.mrf.mxu0
        %v889 = vadd.f32 0.0, %v888
        %v890 = vpop.f32.mrf.mxu0
        %v891 = vadd.f32 0.0, %v890
        %892 = vmatmul.bf16.gmra.mxu0 %v845
        %v893 = vpop.f32.mrf.mxu0
        %v894 = vadd.f32 0.0, %v893
        %v895 = vpop.f32.mrf.mxu0
        %v896 = vadd.f32 0.0, %v895
        %897 = vmatmul.bf16.gmra.mxu0 %v848
        %v898 = vpop.f32.mrf.mxu0
        %v899 = vadd.f32 0.0, %v898
        %v900 = vpop.f32.mrf.mxu0
        %v901 = vadd.f32 0.0, %v900
        %902 = vmatmul.bf16.gmra.mxu0 %v851
        %v903 = vpop.f32.mrf.mxu0
        %v904 = vadd.f32 0.0, %v903
        %v905 = vpop.f32.mrf.mxu0
        %v906 = vadd.f32 0.0, %v905
        %907 = vmatmul.bf16.gmra.mxu0 %v854
        %v908 = vpop.f32.mrf.mxu0
        %v909 = vadd.f32 0.0, %v908
        %v910 = vpop.f32.mrf.mxu0
        %v911 = vadd.f32 0.0, %v910
        %912 = vdwg.mxu0
        %v913 = vpack.c.bf16 %v869, %v869
        %v914 = vpack.c.bf16 %v871, %v871
        %v915 = vpack.c.bf16 %v874, %v874
        %v916 = vpack.c.bf16 %v876, %v876
        %v917 = vpack.c.bf16 %v879, %v879
        %v918 = vpack.c.bf16 %v881, %v881
        %v919 = vpack.c.bf16 %v884, %v884
        %v920 = vpack.c.bf16 %v886, %v886
        %v921 = vpack.c.bf16 %v889, %v889
        %v922 = vpack.c.bf16 %v891, %v891
        %v923 = vpack.c.bf16 %v894, %v894
        %v924 = vpack.c.bf16 %v896, %v896
        %v925 = vpack.c.bf16 %v899, %v899
        %v926 = vpack.c.bf16 %v901, %v901
        %v927 = vpack.c.bf16 %v904, %v904
        %v928 = vpack.c.bf16 %v906, %v906
        %v929 = vpack.c.bf16 %v909, %v909
        %v930 = vpack.c.bf16 %v911, %v911
        %v931 = vld [vmem:[%s4] sm:$0xf]
        %v932 = vld [vmem:[%s4 + $0x4] sm:$0xf]
        %v933 = vld [vmem:[%s4 + $0x8] sm:$0xf]
        %v934 = vld [vmem:[%s4 + $0xc] sm:$0xf]
        %v935 = vld [vmem:[%s4 + $0x10] sm:$0xf]
        %v936 = vld [vmem:[%s4 + $0x14] sm:$0xf]
        %v937 = vld [vmem:[%s4 + $0x18] sm:$0xf]
        %v938 = vld [vmem:[%s4 + $0x1c] sm:$0xf]
        %v939 = vld [vmem:[%s4 + $0x20] sm:$0xf]
        %v940 = vld [vmem:[%s4 + $0x24] sm:$0xf]
        %v941 = vld [vmem:[%s4 + $0x28] sm:$0xf]
        %v942 = vld [vmem:[%s4 + $0x2c] sm:$0xf]
        %v943 = vld [vmem:[%s4 + $0x30] sm:$0xf]
        %v944 = vld [vmem:[%s4 + $0x34] sm:$0xf]
        %v945 = vld [vmem:[%s4 + $0x38] sm:$0xf]
        %v946 = vld [vmem:[%s4 + $0x3c] sm:$0xf]
        %v947 = vld [vmem:[%s4 + $0x40] sm:$0xf]
        %v948 = vld [vmem:[%s4 + $0x44] sm:$0x3]
        %950 = vset.pattern.permute.xlu0 0
        %951 = vperm.xlu0 %950, %v931
        %v952 = vpop.permute.xlu0 %951
        %v955 = vunpack.c.l.s4 839922192
        %v956 = vunpack.c.0.s8 %v955
        %v957 = vperm.slane %v952, %v956
        %959 = vset.pattern.permute.xlu0 0
        %960 = vperm.xlu0 %959, %v932
        %v961 = vpop.permute.xlu0 %960
        %v964 = vunpack.c.l.s4 839922192
        %v965 = vunpack.c.0.s8 %v964
        %v966 = vperm.slane %v961, %v965
        %968 = vset.pattern.permute.xlu0 0
        %969 = vperm.xlu0 %968, %v933
        %v970 = vpop.permute.xlu0 %969
        %v973 = vunpack.c.l.s4 839922192
        %v974 = vunpack.c.0.s8 %v973
        %v975 = vperm.slane %v970, %v974
        %977 = vset.pattern.permute.xlu0 0
        %978 = vperm.xlu0 %977, %v934
        %v979 = vpop.permute.xlu0 %978
        %v982 = vunpack.c.l.s4 839922192
        %v983 = vunpack.c.0.s8 %v982
        %v984 = vperm.slane %v979, %v983
        %986 = vset.pattern.permute.xlu0 0
        %987 = vperm.xlu0 %986, %v935
        %v988 = vpop.permute.xlu0 %987
        %v991 = vunpack.c.l.s4 839922192
        %v992 = vunpack.c.0.s8 %v991
        %v993 = vperm.slane %v988, %v992
        %995 = vset.pattern.permute.xlu0 0
        %996 = vperm.xlu0 %995, %v936
        %v997 = vpop.permute.xlu0 %996
        %v1000 = vunpack.c.l.s4 839922192
        %v1001 = vunpack.c.0.s8 %v1000
        %v1002 = vperm.slane %v997, %v1001
        %1004 = vset.pattern.permute.xlu0 0
        %1005 = vperm.xlu0 %1004, %v937
        %v1006 = vpop.permute.xlu0 %1005
        %v1009 = vunpack.c.l.s4 839922192
        %v1010 = vunpack.c.0.s8 %v1009
        %v1011 = vperm.slane %v1006, %v1010
        %1013 = vset.pattern.permute.xlu0 0
        %1014 = vperm.xlu0 %1013, %v938
        %v1015 = vpop.permute.xlu0 %1014
        %v1018 = vunpack.c.l.s4 839922192
        %v1019 = vunpack.c.0.s8 %v1018
        %v1020 = vperm.slane %v1015, %v1019
        %1022 = vset.pattern.permute.xlu0 0
        %1023 = vperm.xlu0 %1022, %v939
        %v1024 = vpop.permute.xlu0 %1023
        %v1027 = vunpack.c.l.s4 839922192
        %v1028 = vunpack.c.0.s8 %v1027
        %v1029 = vperm.slane %v1024, %v1028
        %1031 = vset.pattern.permute.xlu0 0
        %1032 = vperm.xlu0 %1031, %v940
        %v1033 = vpop.permute.xlu0 %1032
        %v1036 = vunpack.c.l.s4 839922192
        %v1037 = vunpack.c.0.s8 %v1036
        %v1038 = vperm.slane %v1033, %v1037
        %1040 = vset.pattern.permute.xlu0 0
        %1041 = vperm.xlu0 %1040, %v941
        %v1042 = vpop.permute.xlu0 %1041
        %v1045 = vunpack.c.l.s4 839922192
        %v1046 = vunpack.c.0.s8 %v1045
        %v1047 = vperm.slane %v1042, %v1046
        %1049 = vset.pattern.permute.xlu0 0
        %1050 = vperm.xlu0 %1049, %v942
        %v1051 = vpop.permute.xlu0 %1050
        %v1054 = vunpack.c.l.s4 839922192
        %v1055 = vunpack.c.0.s8 %v1054
        %v1056 = vperm.slane %v1051, %v1055
        %1058 = vset.pattern.permute.xlu0 0
        %1059 = vperm.xlu0 %1058, %v943
        %v1060 = vpop.permute.xlu0 %1059
        %v1063 = vunpack.c.l.s4 839922192
        %v1064 = vunpack.c.0.s8 %v1063
        %v1065 = vperm.slane %v1060, %v1064
        %1067 = vset.pattern.permute.xlu0 0
        %1068 = vperm.xlu0 %1067, %v944
        %v1069 = vpop.permute.xlu0 %1068
        %v1072 = vunpack.c.l.s4 839922192
        %v1073 = vunpack.c.0.s8 %v1072
        %v1074 = vperm.slane %v1069, %v1073
        %1076 = vset.pattern.permute.xlu0 0
        %1077 = vperm.xlu0 %1076, %v945
        %v1078 = vpop.permute.xlu0 %1077
        %v1081 = vunpack.c.l.s4 839922192
        %v1082 = vunpack.c.0.s8 %v1081
        %v1083 = vperm.slane %v1078, %v1082
        %1085 = vset.pattern.permute.xlu0 0
        %1086 = vperm.xlu0 %1085, %v946
        %v1087 = vpop.permute.xlu0 %1086
        %v1090 = vunpack.c.l.s4 839922192
        %v1091 = vunpack.c.0.s8 %v1090
        %v1092 = vperm.slane %v1087, %v1091
        %1094 = vset.pattern.permute.xlu0 0
        %1095 = vperm.xlu0 %1094, %v947
        %v1096 = vpop.permute.xlu0 %1095
        %v1099 = vunpack.c.l.s4 839922192
        %v1100 = vunpack.c.0.s8 %v1099
        %v1101 = vperm.slane %v1096, %v1100
        %1103 = vset.pattern.permute.xlu0 0
        %1104 = vperm.xlu0 %1103, %v948
        %v1105 = vpop.permute.xlu0 %1104
        %v1108 = vunpack.c.l.s4 839922192
        %v1109 = vunpack.c.0.s8 %v1108
        %v1110 = vperm.slane %v1105, %v1109
        %v1111 = vunpack.c.l.bf16 %v913
        %v1112 = vunpack.c.l.bf16 %v914
        %v1113 = vunpack.c.l.bf16 %v915
        %v1114 = vunpack.c.l.bf16 %v916
        %v1115 = vunpack.c.l.bf16 %v917
        %v1116 = vunpack.c.l.bf16 %v918
        %v1117 = vunpack.c.l.bf16 %v919
        %v1118 = vunpack.c.l.bf16 %v920
        %v1119 = vunpack.c.l.bf16 %v921
        %v1120 = vunpack.c.l.bf16 %v922
        %v1121 = vunpack.c.l.bf16 %v923
        %v1122 = vunpack.c.l.bf16 %v924
        %v1123 = vunpack.c.l.bf16 %v925
        %v1124 = vunpack.c.l.bf16 %v926
        %v1125 = vunpack.c.l.bf16 %v927
        %v1126 = vunpack.c.l.bf16 %v928
        %v1127 = vunpack.c.l.bf16 %v929
        %v1128 = vunpack.c.l.bf16 %v930
        %v1129 = vunpack.c.l.bf16 %v957
        %v1130 = vunpack.c.l.bf16 %v966
        %v1131 = vunpack.c.l.bf16 %v975
        %v1132 = vunpack.c.l.bf16 %v984
        %v1133 = vunpack.c.l.bf16 %v993
        %v1134 = vunpack.c.l.bf16 %v1002
        %v1135 = vunpack.c.l.bf16 %v1011
        %v1136 = vunpack.c.l.bf16 %v1020
        %v1137 = vunpack.c.l.bf16 %v1029
        %v1138 = vunpack.c.l.bf16 %v1038
        %v1139 = vunpack.c.l.bf16 %v1047
        %v1140 = vunpack.c.l.bf16 %v1056
        %v1141 = vunpack.c.l.bf16 %v1065
        %v1142 = vunpack.c.l.bf16 %v1074
        %v1143 = vunpack.c.l.bf16 %v1083
        %v1144 = vunpack.c.l.bf16 %v1092
        %v1145 = vunpack.c.l.bf16 %v1101
        %v1146 = vunpack.c.l.bf16 %v1110
        %v1147 = vadd.f32 %v1111, %v1129
        %v1148 = vadd.f32 %v1112, %v1130
        %v1149 = vadd.f32 %v1113, %v1131
        %v1150 = vadd.f32 %v1114, %v1132
        %v1151 = vadd.f32 %v1115, %v1133
        %v1152 = vadd.f32 %v1116, %v1134
        %v1153 = vadd.f32 %v1117, %v1135
        %v1154 = vadd.f32 %v1118, %v1136
        %v1155 = vadd.f32 %v1119, %v1137
        %v1156 = vadd.f32 %v1120, %v1138
        %v1157 = vadd.f32 %v1121, %v1139
        %v1158 = vadd.f32 %v1122, %v1140
        %v1159 = vadd.f32 %v1123, %v1141
        %v1160 = vadd.f32 %v1124, %v1142
        %v1161 = vadd.f32 %v1125, %v1143
        %v1162 = vadd.f32 %v1126, %v1144
        %v1163 = vadd.f32 %v1127, %v1145
        %v1164 = vadd.f32 %v1128, %v1146
        %v1165 = vpack.c.bf16 %v1147, %v1147
        %v1166 = vpack.c.bf16 %v1148, %v1148
        %v1167 = vpack.c.bf16 %v1149, %v1149
        %v1168 = vpack.c.bf16 %v1150, %v1150
        %v1169 = vpack.c.bf16 %v1151, %v1151
        %v1170 = vpack.c.bf16 %v1152, %v1152
        %v1171 = vpack.c.bf16 %v1153, %v1153
        %v1172 = vpack.c.bf16 %v1154, %v1154
        %v1173 = vpack.c.bf16 %v1155, %v1155
        %v1174 = vpack.c.bf16 %v1156, %v1156
        %v1175 = vpack.c.bf16 %v1157, %v1157
        %v1176 = vpack.c.bf16 %v1158, %v1158
        %v1177 = vpack.c.bf16 %v1159, %v1159
        %v1178 = vpack.c.bf16 %v1160, %v1160
        %v1179 = vpack.c.bf16 %v1161, %v1161
        %v1180 = vpack.c.bf16 %v1162, %v1162
        %v1181 = vpack.c.bf16 %v1163, %v1163
        %v1182 = vpack.c.bf16 %v1164, %v1164
        %v1183 = vunpack.c.l.bf16 %v1165
        %v1184 = vunpack.c.l.bf16 %v1166
        %v1185 = vunpack.c.l.bf16 %v1167
        %v1186 = vunpack.c.l.bf16 %v1168
        %v1187 = vunpack.c.l.bf16 %v1169
        %v1188 = vunpack.c.l.bf16 %v1170
        %v1189 = vunpack.c.l.bf16 %v1171
        %v1190 = vunpack.c.l.bf16 %v1172
        %v1191 = vunpack.c.l.bf16 %v1173
        %v1192 = vunpack.c.l.bf16 %v1174
        %v1193 = vunpack.c.l.bf16 %v1175
        %v1194 = vunpack.c.l.bf16 %v1176
        %v1195 = vunpack.c.l.bf16 %v1177
        %v1196 = vunpack.c.l.bf16 %v1178
        %v1197 = vunpack.c.l.bf16 %v1179
        %v1198 = vunpack.c.l.bf16 %v1180
        %v1199 = vunpack.c.l.bf16 %v1181
        %v1200 = vunpack.c.l.bf16 %v1182
        %v1201 = vmax.f32 %v1183, 0.0
        %v1202 = vmax.f32 %v1184, 0.0
        %v1203 = vmax.f32 %v1185, 0.0
        %v1204 = vmax.f32 %v1186, 0.0
        %v1205 = vmax.f32 %v1187, 0.0
        %v1206 = vmax.f32 %v1188, 0.0
        %v1207 = vmax.f32 %v1189, 0.0
        %v1208 = vmax.f32 %v1190, 0.0
        %v1209 = vmax.f32 %v1191, 0.0
        %v1210 = vmax.f32 %v1192, 0.0
        %v1211 = vmax.f32 %v1193, 0.0
        %v1212 = vmax.f32 %v1194, 0.0
        %v1213 = vmax.f32 %v1195, 0.0
        %v1214 = vmax.f32 %v1196, 0.0
        %v1215 = vmax.f32 %v1197, 0.0
        %v1216 = vmax.f32 %v1198, 0.0
        %v1217 = vmax.f32 %v1199, 0.0
        %v1218 = vmax.f32 %v1200, 0.0
        %v1219 = vpack.c.bf16 %v1202, %v1201
        %v1220 = vpack.c.bf16 %v1204, %v1203
        %v1221 = vpack.c.bf16 %v1206, %v1205
        %v1222 = vpack.c.bf16 %v1208, %v1207
        %v1223 = vpack.c.bf16 %v1210, %v1209
        %v1224 = vpack.c.bf16 %v1212, %v1211
        %v1225 = vpack.c.bf16 %v1214, %v1213
        %v1226 = vpack.c.bf16 %v1216, %v1215
        %v1227 = vpack.c.bf16 %v1218, %v1217
        %v1228 = vld [vmem:[%s5] sm:$0xff]
        %v1229 = vld [vmem:[%s5 + $0x8] sm:$0xff]
        %v1230 = vld [vmem:[%s5 + $0x10] sm:$0xff]
        %v1231 = vld [vmem:[%s5 + $0x18] sm:$0xff]
        %v1232 = vld [vmem:[%s5 + $0x20] sm:$0xff]
        %v1233 = vld [vmem:[%s5 + $0x28] sm:$0xff]
        %v1234 = vld [vmem:[%s5 + $0x30] sm:$0xff]
        %v1235 = vld [vmem:[%s5 + $0x38] sm:$0xff]
        %v1236 = vld [vmem:[%s5 + $0x40] sm:$0x77]
        %v1246 = vunpack.c.l.b16 %v1228
        %v1247 = vunpack.c.h.b16 %v1228
        %v1248 = vunpack.c.l.b16 %v1229
        %v1249 = vunpack.c.h.b16 %v1229
        %v1250 = vunpack.c.l.b16 %v1230
        %v1251 = vunpack.c.h.b16 %v1230
        %v1252 = vunpack.c.l.b16 %v1231
        %v1253 = vunpack.c.h.b16 %v1231
        %v1254 = vunpack.c.l.b16 %v1232
        %v1255 = vunpack.c.h.b16 %v1232
        %v1256 = vunpack.c.l.b16 %v1233
        %v1257 = vunpack.c.h.b16 %v1233
        %v1258 = vunpack.c.l.b16 %v1234
        %v1259 = vunpack.c.h.b16 %v1234
        %v1260 = vunpack.c.l.b16 %v1235
        %v1261 = vunpack.c.h.b16 %v1235
        %v1262 = vunpack.c.l.b16 %v1236
        %v1263 = vunpack.c.h.b16 %v1236
        %v1264 = vpack.c.b16 %v1248, %v1246
        %v1265 = vpack.c.b16 %v1249, %v1247
        %v1266 = vpack.c.b16 %v1252, %v1250
        %v1267 = vpack.c.b16 %v1253, %v1251
        %v1268 = vpack.c.b16 %v1256, %v1254
        %v1269 = vpack.c.b16 %v1257, %v1255
        %v1270 = vpack.c.b16 %v1260, %v1258
        %v1271 = vpack.c.b16 %v1261, %v1259
        %v1272 = vpack.c.b16 %v1262, %v1262
        %v1273 = vpack.c.b16 %v1263, %v1263
        %vm1279 = vcmask 97280
        %v1281 = vsel %vm1279, %v1265, 0
        %v1284 = vsel %vm1279, %v1267, 0
        %v1287 = vsel %vm1279, %v1269, 0
        %v1290 = vsel %vm1279, %v1271, 0
        %v1293 = vsel %vm1279, %v1273, 0
        %vm1295 = vcmask 1045504
        %v1297 = vsel %vm1295, %v1227, 0
        %1299 = vmatpush.bf16.msra.mxu0 %v1226
        %1300 = vmatpush.bf16.msra.mxu0 %v1225
        %1301 = vmatpush.bf16.msra.mxu0 %v1224
        %1302 = vmatpush.bf16.msra.mxu0 %v1223
        %1303 = vmatpush.bf16.msra.mxu0 %v1222
        %1304 = vmatpush.bf16.msra.mxu0 %v1221
        %1305 = vmatpush.bf16.msra.mxu0 %v1220
        %1306 = vmatpush.bf16.msra.mxu0 %v1219
        %1307 = vmatmul.bf16.gmra.mxu0 %v1264
        %v1308 = vpop.f32.mrf.mxu0
        %v1309 = vadd.f32 0.0, %v1308
        %v1310 = vpop.f32.mrf.mxu0
        %v1311 = vadd.f32 0.0, %v1310
        %1312 = vmatmul.bf16.gmra.mxu0 %v1266
        %v1313 = vpop.f32.mrf.mxu0
        %v1314 = vadd.f32 0.0, %v1313
        %v1315 = vpop.f32.mrf.mxu0
        %v1316 = vadd.f32 0.0, %v1315
        %1317 = vmatmul.bf16.gmra.mxu0 %v1268
        %v1318 = vpop.f32.mrf.mxu0
        %v1319 = vadd.f32 0.0, %v1318
        %v1320 = vpop.f32.mrf.mxu0
        %v1321 = vadd.f32 0.0, %v1320
        %1322 = vmatmul.bf16.gmra.mxu0 %v1270
        %v1323 = vpop.f32.mrf.mxu0
        %v1324 = vadd.f32 0.0, %v1323
        %v1325 = vpop.f32.mrf.mxu0
        %v1326 = vadd.f32 0.0, %v1325
        %1327 = vmatmul.bf16.gmra.mxu0 %v1272
        %v1328 = vpop.f32.mrf.mxu0
        %v1329 = vadd.f32 0.0, %v1328
        %v1330 = vpop.f32.mrf.mxu0
        %1331 = vdwg.mxu0
        %1332 = vmatpush.bf16.msra.mxu0 0
        %1333 = vmatpush.bf16.msra.mxu0 0
        %1334 = vmatpush.bf16.msra.mxu0 0
        %1335 = vmatpush.bf16.msra.mxu0 0
        %1336 = vmatpush.bf16.msra.mxu0 0
        %1337 = vmatpush.bf16.msra.mxu0 0
        %1338 = vmatpush.bf16.msra.mxu0 0
        %1339 = vmatpush.bf16.msra.mxu0 %v1297
        %1340 = vmatmul.bf16.gmra.mxu0 %v1281
        %v1341 = vpop.f32.mrf.mxu0
        %v1342 = vadd.f32 %v1309, %v1341
        %v1343 = vpop.f32.mrf.mxu0
        %v1344 = vadd.f32 %v1311, %v1343
        %1345 = vmatmul.bf16.gmra.mxu0 %v1284
        %v1346 = vpop.f32.mrf.mxu0
        %v1347 = vadd.f32 %v1314, %v1346
        %v1348 = vpop.f32.mrf.mxu0
        %v1349 = vadd.f32 %v1316, %v1348
        %1350 = vmatmul.bf16.gmra.mxu0 %v1287
        %v1351 = vpop.f32.mrf.mxu0
        %v1352 = vadd.f32 %v1319, %v1351
        %v1353 = vpop.f32.mrf.mxu0
        %v1354 = vadd.f32 %v1321, %v1353
        %1355 = vmatmul.bf16.gmra.mxu0 %v1290
        %v1356 = vpop.f32.mrf.mxu0
        %v1357 = vadd.f32 %v1324, %v1356
        %v1358 = vpop.f32.mrf.mxu0
        %v1359 = vadd.f32 %v1326, %v1358
        %1360 = vmatmul.bf16.gmra.mxu0 %v1293
        %v1361 = vpop.f32.mrf.mxu0
        %v1362 = vadd.f32 %v1329, %v1361
        %v1363 = vpop.f32.mrf.mxu0
        %1364 = vdwg.mxu0
        %v1365 = vpack.c.bf16 %v1342, %v1342
        %v1366 = vpack.c.bf16 %v1344, %v1344
        %v1367 = vpack.c.bf16 %v1347, %v1347
        %v1368 = vpack.c.bf16 %v1349, %v1349
        %v1369 = vpack.c.bf16 %v1352, %v1352
        %v1370 = vpack.c.bf16 %v1354, %v1354
        %v1371 = vpack.c.bf16 %v1357, %v1357
        %v1372 = vpack.c.bf16 %v1359, %v1359
        %v1373 = vpack.c.bf16 %v1362, %v1362
        %v1374 = vld [vmem:[%s6] sm:$0xf]
        %v1375 = vld [vmem:[%s6 + $0x4] sm:$0xf]
        %v1376 = vld [vmem:[%s6 + $0x8] sm:$0xf]
        %v1377 = vld [vmem:[%s6 + $0xc] sm:$0xf]
        %v1378 = vld [vmem:[%s6 + $0x10] sm:$0xf]
        %v1379 = vld [vmem:[%s6 + $0x14] sm:$0xf]
        %v1380 = vld [vmem:[%s6 + $0x18] sm:$0xf]
        %v1381 = vld [vmem:[%s6 + $0x1c] sm:$0xf]
        %v1382 = vld [vmem:[%s6 + $0x20] sm:$0x7]
        %1384 = vset.pattern.permute.xlu0 0
        %1385 = vperm.xlu0 %1384, %v1374
        %v1386 = vpop.permute.xlu0 %1385
        %v1389 = vunpack.c.l.s4 839922192
        %v1390 = vunpack.c.0.s8 %v1389
        %v1391 = vperm.slane %v1386, %v1390
        %1393 = vset.pattern.permute.xlu0 0
        %1394 = vperm.xlu0 %1393, %v1375
        %v1395 = vpop.permute.xlu0 %1394
        %v1398 = vunpack.c.l.s4 839922192
        %v1399 = vunpack.c.0.s8 %v1398
        %v1400 = vperm.slane %v1395, %v1399
        %1402 = vset.pattern.permute.xlu0 0
        %1403 = vperm.xlu0 %1402, %v1376
        %v1404 = vpop.permute.xlu0 %1403
        %v1407 = vunpack.c.l.s4 839922192
        %v1408 = vunpack.c.0.s8 %v1407
        %v1409 = vperm.slane %v1404, %v1408
        %1411 = vset.pattern.permute.xlu0 0
        %1412 = vperm.xlu0 %1411, %v1377
        %v1413 = vpop.permute.xlu0 %1412
        %v1416 = vunpack.c.l.s4 839922192
        %v1417 = vunpack.c.0.s8 %v1416
        %v1418 = vperm.slane %v1413, %v1417
        %1420 = vset.pattern.permute.xlu0 0
        %1421 = vperm.xlu0 %1420, %v1378
        %v1422 = vpop.permute.xlu0 %1421
        %v1425 = vunpack.c.l.s4 839922192
        %v1426 = vunpack.c.0.s8 %v1425
        %v1427 = vperm.slane %v1422, %v1426
        %1429 = vset.pattern.permute.xlu0 0
        %1430 = vperm.xlu0 %1429, %v1379
        %v1431 = vpop.permute.xlu0 %1430
        %v1434 = vunpack.c.l.s4 839922192
        %v1435 = vunpack.c.0.s8 %v1434
        %v1436 = vperm.slane %v1431, %v1435
        %1438 = vset.pattern.permute.xlu0 0
        %1439 = vperm.xlu0 %1438, %v1380
        %v1440 = vpop.permute.xlu0 %1439
        %v1443 = vunpack.c.l.s4 839922192
        %v1444 = vunpack.c.0.s8 %v1443
        %v1445 = vperm.slane %v1440, %v1444
        %1447 = vset.pattern.permute.xlu0 0
        %1448 = vperm.xlu0 %1447, %v1381
        %v1449 = vpop.permute.xlu0 %1448
        %v1452 = vunpack.c.l.s4 839922192
        %v1453 = vunpack.c.0.s8 %v1452
        %v1454 = vperm.slane %v1449, %v1453
        %1456 = vset.pattern.permute.xlu0 0
        %1457 = vperm.xlu0 %1456, %v1382
        %v1458 = vpop.permute.xlu0 %1457
        %v1461 = vunpack.c.l.s4 839922192
        %v1462 = vunpack.c.0.s8 %v1461
        %v1463 = vperm.slane %v1458, %v1462
        %v1464 = vunpack.c.l.bf16 %v1365
        %v1465 = vunpack.c.l.bf16 %v1366
        %v1466 = vunpack.c.l.bf16 %v1367
        %v1467 = vunpack.c.l.bf16 %v1368
        %v1468 = vunpack.c.l.bf16 %v1369
        %v1469 = vunpack.c.l.bf16 %v1370
        %v1470 = vunpack.c.l.bf16 %v1371
        %v1471 = vunpack.c.l.bf16 %v1372
        %v1472 = vunpack.c.l.bf16 %v1373
        %v1473 = vunpack.c.l.bf16 %v1391
        %v1474 = vunpack.c.l.bf16 %v1400
        %v1475 = vunpack.c.l.bf16 %v1409
        %v1476 = vunpack.c.l.bf16 %v1418
        %v1477 = vunpack.c.l.bf16 %v1427
        %v1478 = vunpack.c.l.bf16 %v1436
        %v1479 = vunpack.c.l.bf16 %v1445
        %v1480 = vunpack.c.l.bf16 %v1454
        %v1481 = vunpack.c.l.bf16 %v1463
        %v1482 = vadd.f32 %v1464, %v1473
        %v1483 = vadd.f32 %v1465, %v1474
        %v1484 = vadd.f32 %v1466, %v1475
        %v1485 = vadd.f32 %v1467, %v1476
        %v1486 = vadd.f32 %v1468, %v1477
        %v1487 = vadd.f32 %v1469, %v1478
        %v1488 = vadd.f32 %v1470, %v1479
        %v1489 = vadd.f32 %v1471, %v1480
        %v1490 = vadd.f32 %v1472, %v1481
        %v1491 = vpack.c.bf16 %v1482, %v1482
        %v1492 = vpack.c.bf16 %v1483, %v1483
        %v1493 = vpack.c.bf16 %v1484, %v1484
        %v1494 = vpack.c.bf16 %v1485, %v1485
        %v1495 = vpack.c.bf16 %v1486, %v1486
        %v1496 = vpack.c.bf16 %v1487, %v1487
        %v1497 = vpack.c.bf16 %v1488, %v1488
        %v1498 = vpack.c.bf16 %v1489, %v1489
        %v1499 = vpack.c.bf16 %v1490, %v1490
        %v1500 = vunpack.c.l.bf16 %v1491
        %v1501 = vunpack.c.l.bf16 %v1492
        %v1502 = vunpack.c.l.bf16 %v1493
        %v1503 = vunpack.c.l.bf16 %v1494
        %v1504 = vunpack.c.l.bf16 %v1495
        %v1505 = vunpack.c.l.bf16 %v1496
        %v1506 = vunpack.c.l.bf16 %v1497
        %v1507 = vunpack.c.l.bf16 %v1498
        %v1508 = vunpack.c.l.bf16 %v1499
        %v1509 = vmax.f32 %v1500, 0.0
        %v1510 = vmax.f32 %v1501, 0.0
        %v1511 = vmax.f32 %v1502, 0.0
        %v1512 = vmax.f32 %v1503, 0.0
        %v1513 = vmax.f32 %v1504, 0.0
        %v1514 = vmax.f32 %v1505, 0.0
        %v1515 = vmax.f32 %v1506, 0.0
        %v1516 = vmax.f32 %v1507, 0.0
        %v1517 = vmax.f32 %v1508, 0.0
        %v1518 = vpack.c.bf16 %v1510, %v1509
        %v1519 = vpack.c.bf16 %v1512, %v1511
        %v1520 = vpack.c.bf16 %v1514, %v1513
        %v1521 = vpack.c.bf16 %v1516, %v1515
        %v1522 = vpack.c.bf16 %v1517, %v1517
        %v1523 = vld [vmem:[%s7] sm:$0xf]
        %v1524 = vld [vmem:[%s7 + $0x4] sm:$0xf]
        %v1525 = vld [vmem:[%s7 + $0x8] sm:$0xf]
        %v1526 = vld [vmem:[%s7 + $0xc] sm:$0xf]
        %v1527 = vld [vmem:[%s7 + $0x10] sm:$0x3]
        %v1533 = vunpack.c.l.b16 %v1523
        %v1534 = vunpack.c.l.b16 %v1524
        %v1535 = vunpack.c.l.b16 %v1525
        %v1536 = vunpack.c.l.b16 %v1526
        %v1537 = vunpack.c.l.b16 %v1527
        %v1538 = vpack.c.b16 %v1534, %v1533
        %v1539 = vpack.c.b16 %v1536, %v1535
        %v1540 = vpack.c.b16 %v1537, %v1537
        %v1542 = vsel %vm828, %v1538, 0
        %v1545 = vsel %vm828, %v1539, 0
        %v1548 = vsel %vm828, %v1540, 0
        %v1551 = vsel %vm568, %v1522, 0
        %1553 = vmatpush.bf16.msra.mxu0 0
        %1554 = vmatpush.bf16.msra.mxu0 0
        %1555 = vmatpush.bf16.msra.mxu0 0
        %1556 = vmatpush.bf16.msra.mxu0 %v1551
        %1557 = vmatpush.bf16.msra.mxu0 %v1521
        %1558 = vmatpush.bf16.msra.mxu0 %v1520
        %1559 = vmatpush.bf16.msra.mxu0 %v1519
        %1560 = vmatpush.bf16.msra.mxu0 %v1518
        %1561 = vmatmul.bf16.gmra.mxu0 %v1542
        %v1562 = vpop.f32.mrf.mxu0
        %v1563 = vadd.f32 0.0, %v1562
        %v1564 = vpop.f32.mrf.mxu0
        %v1565 = vadd.f32 0.0, %v1564
        %1566 = vmatmul.bf16.gmra.mxu0 %v1545
        %v1567 = vpop.f32.mrf.mxu0
        %v1568 = vadd.f32 0.0, %v1567
        %v1569 = vpop.f32.mrf.mxu0
        %v1570 = vadd.f32 0.0, %v1569
        %1571 = vmatmul.bf16.gmra.mxu0 %v1548
        %v1572 = vpop.f32.mrf.mxu0
        %v1573 = vadd.f32 0.0, %v1572
        %v1574 = vpop.f32.mrf.mxu0
        %1575 = vdwg.mxu0
        %v1576 = vpack.c.bf16 %v1563, %v1563
        %v1577 = vpack.c.bf16 %v1565, %v1565
        %v1578 = vpack.c.bf16 %v1568, %v1568
        %v1579 = vpack.c.bf16 %v1570, %v1570
        %v1580 = vpack.c.bf16 %v1573, %v1573
        %v1581 = vld [vmem:[%s8] sm:$0xf]
        %v1582 = vld [vmem:[%s8 + $0x4] sm:$0xf]
        %v1583 = vld [vmem:[%s8 + $0x8] sm:$0xf]
        %v1584 = vld [vmem:[%s8 + $0xc] sm:$0xf]
        %v1585 = vld [vmem:[%s8 + $0x10] sm:$0x3]
        %1587 = vset.pattern.permute.xlu0 0
        %1588 = vperm.xlu0 %1587, %v1581
        %v1589 = vpop.permute.xlu0 %1588
        %v1592 = vunpack.c.l.s4 839922192
        %v1593 = vunpack.c.0.s8 %v1592
        %v1594 = vperm.slane %v1589, %v1593
        %1596 = vset.pattern.permute.xlu0 0
        %1597 = vperm.xlu0 %1596, %v1582
        %v1598 = vpop.permute.xlu0 %1597
        %v1601 = vunpack.c.l.s4 839922192
        %v1602 = vunpack.c.0.s8 %v1601
        %v1603 = vperm.slane %v1598, %v1602
        %1605 = vset.pattern.permute.xlu0 0
        %1606 = vperm.xlu0 %1605, %v1583
        %v1607 = vpop.permute.xlu0 %1606
        %v1610 = vunpack.c.l.s4 839922192
        %v1611 = vunpack.c.0.s8 %v1610
        %v1612 = vperm.slane %v1607, %v1611
        %1614 = vset.pattern.permute.xlu0 0
        %1615 = vperm.xlu0 %1614, %v1584
        %v1616 = vpop.permute.xlu0 %1615
        %v1619 = vunpack.c.l.s4 839922192
        %v1620 = vunpack.c.0.s8 %v1619
        %v1621 = vperm.slane %v1616, %v1620
        %1623 = vset.pattern.permute.xlu0 0
        %1624 = vperm.xlu0 %1623, %v1585
        %v1625 = vpop.permute.xlu0 %1624
        %v1628 = vunpack.c.l.s4 839922192
        %v1629 = vunpack.c.0.s8 %v1628
        %v1630 = vperm.slane %v1625, %v1629
        %v1631 = vunpack.c.l.bf16 %v1576
        %v1632 = vunpack.c.l.bf16 %v1577
        %v1633 = vunpack.c.l.bf16 %v1578
        %v1634 = vunpack.c.l.bf16 %v1579
        %v1635 = vunpack.c.l.bf16 %v1580
        %v1636 = vunpack.c.l.bf16 %v1594
        %v1637 = vunpack.c.l.bf16 %v1603
        %v1638 = vunpack.c.l.bf16 %v1612
        %v1639 = vunpack.c.l.bf16 %v1621
        %v1640 = vunpack.c.l.bf16 %v1630
        %v1641 = vadd.f32 %v1631, %v1636
        %v1642 = vadd.f32 %v1632, %v1637
        %v1643 = vadd.f32 %v1633, %v1638
        %v1644 = vadd.f32 %v1634, %v1639
        %v1645 = vadd.f32 %v1635, %v1640
        %v1646 = vpack.c.bf16 %v1641, %v1641
        %v1647 = vpack.c.bf16 %v1642, %v1642
        %v1648 = vpack.c.bf16 %v1643, %v1643
        %v1649 = vpack.c.bf16 %v1644, %v1644
        %v1650 = vpack.c.bf16 %v1645, %v1645
        %v1651 = vunpack.c.l.bf16 %v1646
        %v1652 = vunpack.c.l.bf16 %v1647
        %v1653 = vunpack.c.l.bf16 %v1648
        %v1654 = vunpack.c.l.bf16 %v1649
        %v1655 = vunpack.c.l.bf16 %v1650
        %v1656 = vmax.f32 %v1651, 0.0
        %v1657 = vmax.f32 %v1652, 0.0
        %v1658 = vmax.f32 %v1653, 0.0
        %v1659 = vmax.f32 %v1654, 0.0
        %v1660 = vmax.f32 %v1655, 0.0
        %v1661 = vpack.c.bf16 %v1657, %v1656
        %v1662 = vpack.c.bf16 %v1659, %v1658
        %v1663 = vpack.c.bf16 %v1660, %v1660
        %v1664 = vld [vmem:[%s9] sm:$0xf]
        %v1665 = vld [vmem:[%s9 + $0x4] sm:$0xf]
        %v1666 = vld [vmem:[%s9 + $0x8] sm:$0x1]
        %v1670 = vunpack.c.l.b16 %v1664
        %v1671 = vunpack.c.l.b16 %v1665
        %v1672 = vunpack.c.l.b16 %v1666
        %v1673 = vpack.c.b16 %v1671, %v1670
        %v1674 = vpack.c.b16 %v1672, %v1672
        %vm1675 = vcmask 285696
        %v1677 = vsel %vm1675, %v1673, 0
        %v1680 = vsel %vm1675, %v1674, 0
        %vm1682 = vcmask 1040384
        %v1683 = vsel %vm1682, 4294967295, 65535
        %v1684 = vsel %vm567, %v1683, 0
        %v1686 = vand.u32 %v1663, %v1684
        %1688 = vmatpush.bf16.msra.mxu0 0
        %1689 = vmatpush.bf16.msra.mxu0 0
        %1690 = vmatpush.bf16.msra.mxu0 0
        %1691 = vmatpush.bf16.msra.mxu0 0
        %1692 = vmatpush.bf16.msra.mxu0 0
        %1693 = vmatpush.bf16.msra.mxu0 %v1686
        %1694 = vmatpush.bf16.msra.mxu0 %v1662
        %1695 = vmatpush.bf16.msra.mxu0 %v1661
        %1696 = vmatmul.bf16.gmra.mxu0 %v1677
        %v1697 = vpop.f32.mrf.mxu0
        %v1698 = vadd.f32 0.0, %v1697
        %v1699 = vpop.f32.mrf.mxu0
        %v1700 = vadd.f32 0.0, %v1699
        %1701 = vmatmul.bf16.gmra.mxu0 %v1680
        %v1702 = vpop.f32.mrf.mxu0
        %v1703 = vadd.f32 0.0, %v1702
        %v1704 = vpop.f32.mrf.mxu0
        %1705 = vdwg.mxu0
        %v1706 = vpack.c.bf16 %v1698, %v1698
        %v1707 = vpack.c.bf16 %v1700, %v1700
        %v1708 = vpack.c.bf16 %v1703, %v1703
        %v1709 = vld [vmem:[%s10] sm:$0xf]
        %v1710 = vld [vmem:[%s10 + $0x4] sm:$0xf]
        %v1711 = vld [vmem:[%s10 + $0x8] sm:$0x1]
        %1713 = vset.pattern.permute.xlu0 0
        %1714 = vperm.xlu0 %1713, %v1709
        %v1715 = vpop.permute.xlu0 %1714
        %v1718 = vunpack.c.l.s4 839922192
        %v1719 = vunpack.c.0.s8 %v1718
        %v1720 = vperm.slane %v1715, %v1719
        %1722 = vset.pattern.permute.xlu0 0
        %1723 = vperm.xlu0 %1722, %v1710
        %v1724 = vpop.permute.xlu0 %1723
        %v1727 = vunpack.c.l.s4 839922192
        %v1728 = vunpack.c.0.s8 %v1727
        %v1729 = vperm.slane %v1724, %v1728
        %1731 = vset.pattern.permute.xlu0 0
        %1732 = vperm.xlu0 %1731, %v1711
        %v1733 = vpop.permute.xlu0 %1732
        %v1736 = vunpack.c.l.s4 839922192
        %v1737 = vunpack.c.0.s8 %v1736
        %v1738 = vperm.slane %v1733, %v1737
        %v1739 = vunpack.c.l.bf16 %v1706
        %v1740 = vunpack.c.l.bf16 %v1707
        %v1741 = vunpack.c.l.bf16 %v1708
        %v1742 = vunpack.c.l.bf16 %v1720
        %v1743 = vunpack.c.l.bf16 %v1729
        %v1744 = vunpack.c.l.bf16 %v1738
        %v1745 = vadd.f32 %v1739, %v1742
        %v1746 = vadd.f32 %v1740, %v1743
        %v1747 = vadd.f32 %v1741, %v1744
        %v1748 = vpack.c.bf16 %v1745, %v1745
        %v1749 = vpack.c.bf16 %v1746, %v1746
        %v1750 = vpack.c.bf16 %v1747, %v1747
        %v1751 = vunpack.c.l.bf16 %v1748
        %v1752 = vunpack.c.l.bf16 %v1749
        %v1753 = vunpack.c.l.bf16 %v1750
        %v1754 = vmax.f32 %v1751, 0.0
        %v1755 = vmax.f32 %v1752, 0.0
        %v1756 = vmax.f32 %v1753, 0.0
        %v1757 = vpack.c.bf16 %v1755, %v1754
        %v1758 = vpack.c.bf16 %v1756, %v1756
        %v1759 = vld [vmem:[%s11] sm:$0x3]
        %v1760 = vld [vmem:[%s12] sm:$0x3]
        %v1761 = vunpack.c.l.bf16 %v1760
        %1763 = vset.pattern.permute.xlu0 0
        %1764 = vperm.xlu0 %1763, %v1761
        %v1765 = vpop.permute.xlu0 %1764
        %v1768 = vunpack.c.l.s4 839922192
        %v1769 = vunpack.c.0.s8 %v1768
        %v1770 = vperm.slane %v1765, %v1769
        %vm1771 = vcmask 138240
        %v1773 = vsel %vm1771, %v1759, 0
        %v1775 = vsel 0, 4294967295, 65535
        %v1776 = vsel %vm1682, %v1775, 0
        %v1778 = vand.u32 %v1758, %v1776
        %1780 = vmatpush.bf16.msra.mxu0 0
        %1781 = vmatpush.bf16.msra.mxu0 0
        %1782 = vmatpush.bf16.msra.mxu0 0
        %1783 = vmatpush.bf16.msra.mxu0 0
        %1784 = vmatpush.bf16.msra.mxu0 0
        %1785 = vmatpush.bf16.msra.mxu0 0
        %1786 = vmatpush.bf16.msra.mxu0 %v1778
        %1787 = vmatpush.bf16.msra.mxu0 %v1757
        %1788 = vmatmul.bf16.gmra.mxu0 %v1773
        %v1789 = vpop.f32.mrf.mxu0
        %v1790 = vadd.f32 %v1770, %v1789
        %v1791 = vpop.f32.mrf.mxu0
        %1792 = vdwg.mxu0
        %vm1793 = vcmask 1043456
        %v1794 = vsel %vm1793, %v1790, -inf
        %v1795 = vrot.slane %v1794, 4
        %v1796 = vmax.f32 %v1794, %v1795
        %v1797 = vrot.slane %v1796, 2
        %v1798 = vmax.f32 %v1796, %v1797
        %v1799 = vrot.slane %v1798, 1
        %v1800 = vmax.f32 %v1798, %v1799
        %v1801 = vsub.f32 %v1790, %v1800
        %v1802 = vmul.f32 %v1801, 1.442695
        %v1803 = vpow.pop %v1802
        %v1804 = vsel %vm1793, %v1803, 0.0
        %v1805 = vrot.slane %v1804, 4
        %v1806 = vadd.f32 %v1804, %v1805
        %v1807 = vrot.slane %v1806, 2
        %v1808 = vadd.f32 %v1806, %v1807
        %v1809 = vrot.slane %v1808, 1
        %v1810 = vadd.f32 %v1808, %v1809
        %v1811 = vrcp.pop %v1810
        %v1812 = vmul.f32 %v1803, %v1811
        %1813 = vst [vmem:[%s497] sm:$0xf] %v1812
        %p1814 = scmp.lt.s32.totalorder %s24, 1
        %s1815 = scalar_select %p1814, %s24, 1
        %s1816 = smul.addr %s1815, 4
        %s1817 = scalar_lea.vmem %s13, %s1816
        // Predicated region
        $region114: #{multiclass_forward.1} parent=108 // pred_check
          %p1818 = pneg %p320
        $region115: #{multiclass_forward.1} parent=108 // pred_check_branch
          %1820 = sbr.rel (%p1818) target = $region117
        $region116: #{multiclass_forward.1} parent=108 // pred_region
          _
        $region117: #{multiclass_forward.1} parent=108 // pred_fallthru
          _
      $region109: #{multiclass_forward.1} parent=5 // pred_fallthru
        _
      %p1821 = scmp.le.s32.totalorder 2, %s19
      // Predicated region
      $region118: #{multiclass_forward.1} parent=5 // pred_check
        %p1822 = pneg %p1821
      $region119: #{multiclass_forward.1} parent=5 // pred_check_branch
        %1824 = sbr.rel (%p1822) target = $region121
      $region120: #{multiclass_forward.1} parent=5 // pred_region
        %s1825 = ssub.s32 %s19, 2
        // Predicated region
        $region122: #{multiclass_forward.1} parent=120 // pred_check
          %p1826 = pneg %p326
        $region123: #{multiclass_forward.1} parent=120 // pred_check_branch
          %1828 = sbr.rel (%p1826) target = $region125
        $region124: #{multiclass_forward.1} parent=120 // pred_region
          %p1829 = scmp.lt.s32.totalorder %s25, 1
          %s1830 = scalar_select %p1829, %s25, 1
          %s1831 = smul.addr %s1830, 4
          %s1832 = scalar_lea.vmem %s13, %s1831
        $region125: #{multiclass_forward.1} parent=120 // pred_fallthru
          _
      $region121: #{multiclass_forward.1} parent=5 // pred_fallthru
        _
    $region6: #{multiclass_forward.1} parent=1 // loop_footer
      %s23 = sadd.s32 1, %s19
    $region7: #{multiclass_forward.1} parent=1 // loop_footer_branch
      %18 = sbr.rel target = $region3
    $region8: #{multiclass_forward.1} parent=1 // loop_exit
      _

</llo_original>
